<compile_context>
chip_gen: v5e
topology: v5e:2x2
jax: 0.10.0
libtpu: 0.0.40
codegen_flags: <defaults>
</compile_context>

<pallas_src>
import numpy as np
import jax
import jax.numpy as jnp
from jax import lax
from jax.experimental import pallas as pl
from jax.experimental.pallas import tpu as pltpu

OBS_SIZE = 16      # obs_size (small synthetic choice)
N_ACTIONS = 4      # n_actions
F1 = 381           # fc1 output size == LSTM input size
H = 70             # LSTM hidden size


def _round_up(x, m):
    return (x + m - 1) // m * m


F1P = _round_up(F1, 128)          # 384
HP = 128                          # padded hidden (one lane slot)
GP = 4 * HP                       # 512: padded gates, slot order [i, f, o, g]
OBSP = _round_up(OBS_SIZE, 128)   # 128
NAP = _round_up(N_ACTIONS, 128)   # 128
BLOCK_B = 256                     # batch rows per grid step (caps VMEM for large B)


def aq_kernel(x_ref, w1_ref, b1_ref, wih_ref, whh_ref, bl_ref, w3_ref, b3_ref,
              out_ref, gx_scr, h_scr, c_scr):
    hp = whh_ref.shape[0]          # 128 (padded hidden)

    # ---- carried LSTM state: zero-init on the first batch block ---------------------
    @pl.when(pl.program_id(0) == 0)
    def _():
        h_scr[...] = jnp.zeros_like(h_scr)
        c_scr[...] = jnp.zeros_like(c_scr)

    # ---- fc1 + ReLU (bf16 MXU, f32 accumulate) --------------------------------------
    h1 = jnp.maximum(
        jnp.dot(x_ref[...], w1_ref[...], preferred_element_type=jnp.float32)
        + b1_ref[...], 0.0)

    # ---- hoisted LSTM input projection: one batched matmul per batch block ----------
    # gates_x[t] = relu(fc1(x))[t] @ W_ih + (b_ih + b_hh); i/f/o slots are pre-scaled
    # by 0.5 (offline) so one tanh later yields both sigmoid and tanh gates.
    gx_scr[...] = jnp.dot(h1.astype(jnp.bfloat16), wih_ref[...],
                          preferred_element_type=jnp.float32) + bl_ref[...]

    # ---- LSTM over the (batch == sequence) axis, batch=1 -----------------------------
    # (h, c) live in the loop carry (vregs); only the small bf16 h @ W_hh matmul and a
    # single tanh over all gates are on the serial path.  The per-window fc3 matmul
    # hides under the next window's recurrence.
    n_windows = gx_scr.shape[0] // 8    # static

    def window_step(w, carry):
        h, c = carry
        base = pl.multiple_of(w * 8, 8)
        gx_win = gx_scr[pl.ds(base, 8), :]          # one aligned (8, GP) load
        rows = []
        for j in range(8):                           # unrolled 8-step window
            gates = gx_win[j:j + 1, :] + jnp.dot(
                h.astype(jnp.bfloat16), whh_ref[...],
                preferred_element_type=jnp.float32)  # (1, 4*HP)
            t = jnp.tanh(gates)                      # single EUP pass, all 4 gates
            ifo = 0.5 * t[:, :3 * hp] + 0.5          # sigmoid(z) = 0.5*tanh(z/2)+0.5
            g = t[:, 3 * hp:]
            c = ifo[:, hp:2 * hp] * c + ifo[:, :hp] * g
            h = ifo[:, 2 * hp:] * jnp.tanh(c)
            rows.append(h)
        hwin = jnp.concatenate(rows, axis=0)         # (8, HP)
        # fused ReLU + fc3 for this window -> one aligned (8, NAP) store
        out_ref[pl.ds(base, 8), :] = jnp.dot(
            jnp.maximum(hwin, 0.0).astype(jnp.bfloat16), w3_ref[...],
            preferred_element_type=jnp.float32) + b3_ref[...]
        return (h, c)

    hN, cN = lax.fori_loop(0, n_windows, window_step, (h_scr[...], c_scr[...]))
    h_scr[...] = hN
    c_scr[...] = cN


def init_params(key):
    """Deterministic synthetic parameters (PyTorch-like uniform init)."""
    ks = jax.random.split(key, 7)

    def u(k, shape, fan_in):
        bound = 1.0 / np.sqrt(fan_in)
        return jax.random.uniform(k, shape, jnp.float32, -bound, bound)

    return dict(
        w1=u(ks[0], (OBS_SIZE, F1), OBS_SIZE),
        b1=u(ks[1], (F1,), OBS_SIZE),
        # gate order (PyTorch): i, f, g, o stacked along the 4*H axis
        w_ih=u(ks[2], (F1, 4 * H), H),
        w_hh=u(ks[3], (H, 4 * H), H),
        b_l=u(ks[4], (4 * H,), H),      # combined b_ih + b_hh
        w3=u(ks[5], (H, N_ACTIONS), H),
        b3=u(ks[6], (N_ACTIONS,), H),
    )


def prepare_padded_params(params):
    """Pad, gate-reorder and pre-scale weights once, outside the jitted forward."""
    w1p = jnp.zeros((OBSP, F1P), jnp.bfloat16).at[:OBS_SIZE, :F1].set(
        params["w1"].astype(jnp.bfloat16))
    b1p = jnp.zeros((1, F1P), jnp.float32).at[0, :F1].set(params["b1"])

    wihp = jnp.zeros((F1P, GP), jnp.float32)
    whhp = jnp.zeros((HP, GP), jnp.float32)
    blp = jnp.zeros((1, GP), jnp.float32)
    # kernel slot order: i, f, o, g   (PyTorch stacks i, f, g, o)
    # i/f/o slots carry a 0.5 pre-scale so sigmoid(z) == 0.5*tanh(gates) + 0.5
    slot_to_torch = (0, 1, 3, 2)
    for slot, tg in enumerate(slot_to_torch):
        s = 0.5 if slot < 3 else 1.0
        wihp = wihp.at[:F1, slot * HP:slot * HP + H].set(
            s * params["w_ih"][:, tg * H:(tg + 1) * H])
        whhp = whhp.at[:H, slot * HP:slot * HP + H].set(
            s * params["w_hh"][:, tg * H:(tg + 1) * H])
        blp = blp.at[0, slot * HP:slot * HP + H].set(
            s * params["b_l"][tg * H:(tg + 1) * H])

    w3p = jnp.zeros((HP, NAP), jnp.bfloat16).at[:H, :N_ACTIONS].set(
        params["w3"].astype(jnp.bfloat16))
    b3p = jnp.zeros((1, NAP), jnp.float32).at[0, :N_ACTIONS].set(params["b3"])
    return dict(w1=w1p, b1=b1p,
                wih=wihp.astype(jnp.bfloat16),   # bf16 MXU inputs, f32 accumulate
                whh=whhp.astype(jnp.bfloat16),
                bl=blp, w3=w3p, b3=b3p)


@jax.jit
def aq_network_logits(x, pp):
    """Kernel call: returns the pre-softmax fc3 output (B, n_actions)."""
    B, obs = x.shape
    blk = min(BLOCK_B, _round_up(max(B, 8), 8))     # batch rows per grid step
    BP = _round_up(max(B, 8), blk)
    n_blocks = BP // blk

    xp = jnp.zeros((BP, OBSP), jnp.bfloat16).at[:B, :obs].set(x.astype(jnp.bfloat16))

    logits_p = pl.pallas_call(
        aq_kernel,
        out_shape=jax.ShapeDtypeStruct((BP, NAP), jnp.float32),
        grid=(n_blocks,),
        in_specs=[
            pl.BlockSpec((blk, OBSP), lambda i: (i, 0)),   # x       (batch-tiled)
            pl.BlockSpec((OBSP, F1P), lambda i: (0, 0)),   # w1      (resident)
            pl.BlockSpec((1, F1P), lambda i: (0, 0)),      # b1
            pl.BlockSpec((F1P, GP), lambda i: (0, 0)),     # w_ih
            pl.BlockSpec((HP, GP), lambda i: (0, 0)),      # w_hh
            pl.BlockSpec((1, GP), lambda i: (0, 0)),       # lstm bias
            pl.BlockSpec((HP, NAP), lambda i: (0, 0)),     # w3
            pl.BlockSpec((1, NAP), lambda i: (0, 0)),      # b3
        ],
        out_specs=pl.BlockSpec((blk, NAP), lambda i: (i, 0)),
        scratch_shapes=[
            pltpu.VMEM((blk, GP), jnp.float32),   # hoisted input-projection gates
            pltpu.VMEM((1, HP), jnp.float32),     # carried h (across batch blocks)
            pltpu.VMEM((1, HP), jnp.float32),     # carried c
        ],
        compiler_params=pltpu.CompilerParams(
            # the recurrence carries h/c across batch blocks -> sequential axis
            dimension_semantics=("arbitrary",)),
    )(xp, pp["w1"], pp["b1"], pp["wih"], pp["whh"], pp["bl"], pp["w3"], pp["b3"])

    return logits_p[:B, :N_ACTIONS]


def aq_network_forward(x, pp):
    logits = aq_network_logits(x, pp)
    B = x.shape[0]
    # PyTorch: nn.Softmax(dim=1) over the singleton sequence dim of (B, 1, n_actions)
    # (trivially all ones over a size-1 axis); kept in the wrapper as glue to mirror
    # the original module exactly.
    return jax.nn.softmax(logits.reshape(B, 1, N_ACTIONS), axis=1)


def reference_logits(x, params):
    """Pure-JAX f32 reference of the same forward (pre-softmax), for validation."""
    h1 = jnp.maximum(x @ params["w1"] + params["b1"], 0.0)

    def step(carry, x_t):
        h, c = carry
        gates = x_t @ params["w_ih"] + h @ params["w_hh"] + params["b_l"]
        i = jax.nn.sigmoid(gates[0:H])
        f = jax.nn.sigmoid(gates[H:2 * H])
        g = jnp.tanh(gates[2 * H:3 * H])
        o = jax.nn.sigmoid(gates[3 * H:4 * H])
        c = f * c + i * g
        h = o * jnp.tanh(c)
        return (h, c), h

    (_, _), hs = lax.scan(step, (jnp.zeros(H), jnp.zeros(H)), h1)
    hr = jnp.maximum(hs, 0.0)
    return hr @ params["w3"] + params["b3"]


if __name__ == "__main__":
    key = jax.random.PRNGKey(0)
    pkey, xkey = jax.random.split(key)
    params = init_params(pkey)
    padded = prepare_padded_params(params)           # once, outside the jitted forward
    x = jax.random.normal(xkey, (8, OBS_SIZE), jnp.float32)

    logits = jax.block_until_ready(aq_network_logits(x, padded))
    ref = jax.block_until_ready(reference_logits(x, params))
    assert logits.shape == (8, N_ACTIONS), logits.shape
    assert np.allclose(np.asarray(logits), np.asarray(ref), atol=8e-2, rtol=8e-2), (
        np.max(np.abs(np.asarray(logits) - np.asarray(ref))))

    out = jax.block_until_ready(aq_network_forward(x, padded))
    assert out.shape == (8, 1, N_ACTIONS), out.shape
    # softmax over the singleton dim=1 must yield exactly ones (mirrors PyTorch)
    assert np.allclose(np.asarray(out), 1.0, atol=1e-5), out
    print("KERNEL_OK")
</pallas_src>

<mosaic_0001>
module attributes {stable_mosaic.version = 11 : i64} {
  func.func @aq_kernel(%arg0: i32, %arg1: memref<8x128xbf16, #tpu.memory_space<vmem>>, %arg2: memref<128x384xbf16, #tpu.memory_space<vmem>>, %arg3: memref<1x384xf32, #tpu.memory_space<vmem>>, %arg4: memref<384x512xbf16, #tpu.memory_space<vmem>>, %arg5: memref<128x512xbf16, #tpu.memory_space<vmem>>, %arg6: memref<1x512xf32, #tpu.memory_space<vmem>>, %arg7: memref<128x128xbf16, #tpu.memory_space<vmem>>, %arg8: memref<1x128xf32, #tpu.memory_space<vmem>>, %arg9: memref<8x128xf32, #tpu.memory_space<vmem>>, %arg10: memref<8x512xf32, #tpu.memory_space<vmem>>, %arg11: memref<1x128xf32, #tpu.memory_space<vmem>>, %arg12: memref<1x128xf32, #tpu.memory_space<vmem>>) attributes {dimension_semantics = [#tpu.dimension_semantics<arbitrary>], iteration_bounds = array<i64: 1>, scalar_prefetch = 0 : i64, scratch_operands = 3 : i64, tpu.core_type = #tpu.core_type<tc>, window_params = [{transform_indices = @transform_0, window_bounds = array<i64: 8, 128>}, {pipeline_mode = #tpu.pipeline_mode<synchronous>, transform_indices = @transform_1, window_bounds = array<i64: 128, 384>}, {pipeline_mode = #tpu.pipeline_mode<synchronous>, transform_indices = @transform_2, window_bounds = array<i64: 1, 384>}, {pipeline_mode = #tpu.pipeline_mode<synchronous>, transform_indices = @transform_3, window_bounds = array<i64: 384, 512>}, {pipeline_mode = #tpu.pipeline_mode<synchronous>, transform_indices = @transform_4, window_bounds = array<i64: 128, 512>}, {pipeline_mode = #tpu.pipeline_mode<synchronous>, transform_indices = @transform_5, window_bounds = array<i64: 1, 512>}, {pipeline_mode = #tpu.pipeline_mode<synchronous>, transform_indices = @transform_6, window_bounds = array<i64: 128, 128>}, {pipeline_mode = #tpu.pipeline_mode<synchronous>, transform_indices = @transform_7, window_bounds = array<i64: 1, 128>}, {transform_indices = @transform_8, window_bounds = array<i64: 8, 128>}]} {
    %c0_i32 = arith.constant 0 : i32
    %0 = arith.cmpi eq, %arg0, %c0_i32 : i32
    %1 = arith.extui %0 : i1 to i32
    %c0_i32_0 = arith.constant 0 : i32
    %2 = arith.cmpi ne, %1, %c0_i32_0 : i32
    scf.if %2 {
      %cst_71 = arith.constant 0.000000e+00 : f32
      %197 = vector.broadcast %cst_71 : f32 to vector<1x128xf32>
      %c0_72 = arith.constant 0 : index
      %c0_73 = arith.constant 0 : index
      %198 = vector.load %arg11[%c0_72, %c0_73] : memref<1x128xf32, #tpu.memory_space<vmem>>, vector<1x128xf32>
      tpu.vector_store %arg11[%c0_72, %c0_73], %197 {strides = array<i32>} : memref<1x128xf32, #tpu.memory_space<vmem>>, vector<1x128xf32>,
      %cst_74 = arith.constant 0.000000e+00 : f32
      %199 = vector.broadcast %cst_74 : f32 to vector<1x128xf32>
      %c0_75 = arith.constant 0 : index
      %c0_76 = arith.constant 0 : index
      %200 = vector.load %arg12[%c0_75, %c0_76] : memref<1x128xf32, #tpu.memory_space<vmem>>, vector<1x128xf32>
      tpu.vector_store %arg12[%c0_75, %c0_76], %199 {strides = array<i32>} : memref<1x128xf32, #tpu.memory_space<vmem>>, vector<1x128xf32>,
    } else {
    }
    %c0 = arith.constant 0 : index
    %c0_1 = arith.constant 0 : index
    %3 = vector.load %arg1[%c0, %c0_1] : memref<8x128xbf16, #tpu.memory_space<vmem>>, vector<8x128xbf16>
    %c0_2 = arith.constant 0 : index
    %c0_3 = arith.constant 0 : index
    %4 = vector.load %arg2[%c0_2, %c0_3] : memref<128x384xbf16, #tpu.memory_space<vmem>>, vector<128x384xbf16>
    %cst = arith.constant dense<0.000000e+00> : vector<8x384xf32>
    %5 = tpu.matmul %3, %4, %cst {dimension_numbers = #tpu.dot_dimension_numbers<[1], [0], [0], [1], [0, 0, 1, 1], [], []>} : vector<8x128xbf16>, vector<128x384xbf16>, vector<8x384xf32> -> vector<8x384xf32>
    %c0_4 = arith.constant 0 : index
    %c0_5 = arith.constant 0 : index
    %6 = vector.load %arg3[%c0_4, %c0_5] : memref<1x384xf32, #tpu.memory_space<vmem>>, vector<1x384xf32>
    %7 = vector.broadcast %6 : vector<1x384xf32> to vector<8x384xf32>
    %8 = arith.addf %5, %7 : vector<8x384xf32>
    %cst_6 = arith.constant 0.000000e+00 : f32
    %9 = vector.broadcast %cst_6 : f32 to vector<8x384xf32>
    %10 = arith.maximumf %8, %9 : vector<8x384xf32>
    %11 = arith.truncf %10 : vector<8x384xf32> to vector<8x384xbf16>
    %c0_7 = arith.constant 0 : index
    %c0_8 = arith.constant 0 : index
    %12 = vector.load %arg4[%c0_7, %c0_8] : memref<384x512xbf16, #tpu.memory_space<vmem>>, vector<384x512xbf16>
    %cst_9 = arith.constant dense<0.000000e+00> : vector<8x512xf32>
    %13 = tpu.matmul %11, %12, %cst_9 {dimension_numbers = #tpu.dot_dimension_numbers<[1], [0], [0], [1], [0, 0, 1, 1], [], []>} : vector<8x384xbf16>, vector<384x512xbf16>, vector<8x512xf32> -> vector<8x512xf32>
    %c0_10 = arith.constant 0 : index
    %c0_11 = arith.constant 0 : index
    %14 = vector.load %arg6[%c0_10, %c0_11] : memref<1x512xf32, #tpu.memory_space<vmem>>, vector<1x512xf32>
    %15 = vector.broadcast %14 : vector<1x512xf32> to vector<8x512xf32>
    %16 = arith.addf %13, %15 : vector<8x512xf32>
    %c0_12 = arith.constant 0 : index
    %c0_13 = arith.constant 0 : index
    %17 = vector.load %arg10[%c0_12, %c0_13] : memref<8x512xf32, #tpu.memory_space<vmem>>, vector<8x512xf32>
    tpu.vector_store %arg10[%c0_12, %c0_13], %16 {strides = array<i32>} : memref<8x512xf32, #tpu.memory_space<vmem>>, vector<8x512xf32>,
    %c0_14 = arith.constant 0 : index
    %c0_15 = arith.constant 0 : index
    %18 = vector.load %arg11[%c0_14, %c0_15] : memref<1x128xf32, #tpu.memory_space<vmem>>, vector<1x128xf32>
    %c0_16 = arith.constant 0 : index
    %c0_17 = arith.constant 0 : index
    %19 = vector.load %arg12[%c0_16, %c0_17] : memref<1x128xf32, #tpu.memory_space<vmem>>, vector<1x128xf32>
    %c0_i32_18 = arith.constant 0 : i32
    %c8_i32 = arith.constant 8 : i32
    %20 = arith.muli %c0_i32_18, %c8_i32 : i32
    %21 = tpu.assume_multiple %20, 8 : i32
    %22 = arith.index_cast %21 : i32 to index
    %c0_19 = arith.constant 0 : index
    %23 = vector.load %arg10[%22, %c0_19] : memref<8x512xf32, #tpu.memory_space<vmem>>, vector<8x512xf32>
    %24 = vector.extract_strided_slice %23 {offsets = [0, 0], sizes = [1, 512], strides = [1, 1]} : vector<8x512xf32> to vector<1x512xf32>
    %25 = arith.truncf %18 : vector<1x128xf32> to vector<1x128xbf16>
    %c0_20 = arith.constant 0 : index
    %c0_21 = arith.constant 0 : index
    %26 = vector.load %arg5[%c0_20, %c0_21] : memref<128x512xbf16, #tpu.memory_space<vmem>>, vector<128x512xbf16>
    %cst_22 = arith.constant dense<0.000000e+00> : vector<1x512xf32>
    %27 = tpu.matmul %25, %26, %cst_22 {dimension_numbers = #tpu.dot_dimension_numbers<[1], [0], [0], [1], [0, 0, 1, 1], [], []>} : vector<1x128xbf16>, vector<128x512xbf16>, vector<1x512xf32> -> vector<1x512xf32>
    %28 = arith.addf %24, %27 : vector<1x512xf32>
    %29 = math.tanh %28 : vector<1x512xf32>
    %30 = vector.extract_strided_slice %29 {offsets = [0, 0], sizes = [1, 384], strides = [1, 1]} : vector<1x512xf32> to vector<1x384xf32>
    %cst_23 = arith.constant 5.000000e-01 : f32
    %31 = vector.broadcast %cst_23 : f32 to vector<1x384xf32>
    %32 = arith.mulf %31, %30 : vector<1x384xf32>
    %cst_24 = arith.constant 5.000000e-01 : f32
    %33 = vector.broadcast %cst_24 : f32 to vector<1x384xf32>
    %34 = arith.addf %32, %33 : vector<1x384xf32>
    %35 = vector.extract_strided_slice %29 {offsets = [0, 384], sizes = [1, 128], strides = [1, 1]} : vector<1x512xf32> to vector<1x128xf32>
    %36 = vector.extract_strided_slice %34 {offsets = [0, 128], sizes = [1, 128], strides = [1, 1]} : vector<1x384xf32> to vector<1x128xf32>
    %37 = arith.mulf %36, %19 : vector<1x128xf32>
    %38 = vector.extract_strided_slice %34 {offsets = [0, 0], sizes = [1, 128], strides = [1, 1]} : vector<1x384xf32> to vector<1x128xf32>
    %39 = arith.mulf %38, %35 : vector<1x128xf32>
    %40 = arith.addf %37, %39 : vector<1x128xf32>
    %41 = vector.extract_strided_slice %34 {offsets = [0, 256], sizes = [1, 128], strides = [1, 1]} : vector<1x384xf32> to vector<1x128xf32>
    %42 = math.tanh %40 : vector<1x128xf32>
    %43 = arith.mulf %41, %42 : vector<1x128xf32>
    %44 = vector.extract_strided_slice %23 {offsets = [1, 0], sizes = [1, 512], strides = [1, 1]} : vector<8x512xf32> to vector<1x512xf32>
    %45 = arith.truncf %43 : vector<1x128xf32> to vector<1x128xbf16>
    %c0_25 = arith.constant 0 : index
    %c0_26 = arith.constant 0 : index
    %46 = vector.load %arg5[%c0_25, %c0_26] : memref<128x512xbf16, #tpu.memory_space<vmem>>, vector<128x512xbf16>
    %cst_27 = arith.constant dense<0.000000e+00> : vector<1x512xf32>
    %47 = tpu.matmul %45, %46, %cst_27 {dimension_numbers = #tpu.dot_dimension_numbers<[1], [0], [0], [1], [0, 0, 1, 1], [], []>} : vector<1x128xbf16>, vector<128x512xbf16>, vector<1x512xf32> -> vector<1x512xf32>
    %48 = arith.addf %44, %47 : vector<1x512xf32>
    %49 = math.tanh %48 : vector<1x512xf32>
    %50 = vector.extract_strided_slice %49 {offsets = [0, 0], sizes = [1, 384], strides = [1, 1]} : vector<1x512xf32> to vector<1x384xf32>
    %cst_28 = arith.constant 5.000000e-01 : f32
    %51 = vector.broadcast %cst_28 : f32 to vector<1x384xf32>
    %52 = arith.mulf %51, %50 : vector<1x384xf32>
    %cst_29 = arith.constant 5.000000e-01 : f32
    %53 = vector.broadcast %cst_29 : f32 to vector<1x384xf32>
    %54 = arith.addf %52, %53 : vector<1x384xf32>
    %55 = vector.extract_strided_slice %49 {offsets = [0, 384], sizes = [1, 128], strides = [1, 1]} : vector<1x512xf32> to vector<1x128xf32>
    %56 = vector.extract_strided_slice %54 {offsets = [0, 128], sizes = [1, 128], strides = [1, 1]} : vector<1x384xf32> to vector<1x128xf32>
    %57 = arith.mulf %56, %40 : vector<1x128xf32>
    %58 = vector.extract_strided_slice %54 {offsets = [0, 0], sizes = [1, 128], strides = [1, 1]} : vector<1x384xf32> to vector<1x128xf32>
    %59 = arith.mulf %58, %55 : vector<1x128xf32>
    %60 = arith.addf %57, %59 : vector<1x128xf32>
    %61 = vector.extract_strided_slice %54 {offsets = [0, 256], sizes = [1, 128], strides = [1, 1]} : vector<1x384xf32> to vector<1x128xf32>
    %62 = math.tanh %60 : vector<1x128xf32>
    %63 = arith.mulf %61, %62 : vector<1x128xf32>
    %64 = vector.extract_strided_slice %23 {offsets = [2, 0], sizes = [1, 512], strides = [1, 1]} : vector<8x512xf32> to vector<1x512xf32>
    %65 = arith.truncf %63 : vector<1x128xf32> to vector<1x128xbf16>
    %c0_30 = arith.constant 0 : index
    %c0_31 = arith.constant 0 : index
    %66 = vector.load %arg5[%c0_30, %c0_31] : memref<128x512xbf16, #tpu.memory_space<vmem>>, vector<128x512xbf16>
    %cst_32 = arith.constant dense<0.000000e+00> : vector<1x512xf32>
    %67 = tpu.matmul %65, %66, %cst_32 {dimension_numbers = #tpu.dot_dimension_numbers<[1], [0], [0], [1], [0, 0, 1, 1], [], []>} : vector<1x128xbf16>, vector<128x512xbf16>, vector<1x512xf32> -> vector<1x512xf32>
    %68 = arith.addf %64, %67 : vector<1x512xf32>
    %69 = math.tanh %68 : vector<1x512xf32>
    %70 = vector.extract_strided_slice %69 {offsets = [0, 0], sizes = [1, 384], strides = [1, 1]} : vector<1x512xf32> to vector<1x384xf32>
    %cst_33 = arith.constant 5.000000e-01 : f32
    %71 = vector.broadcast %cst_33 : f32 to vector<1x384xf32>
    %72 = arith.mulf %71, %70 : vector<1x384xf32>
    %cst_34 = arith.constant 5.000000e-01 : f32
    %73 = vector.broadcast %cst_34 : f32 to vector<1x384xf32>
    %74 = arith.addf %72, %73 : vector<1x384xf32>
    %75 = vector.extract_strided_slice %69 {offsets = [0, 384], sizes = [1, 128], strides = [1, 1]} : vector<1x512xf32> to vector<1x128xf32>
    %76 = vector.extract_strided_slice %74 {offsets = [0, 128], sizes = [1, 128], strides = [1, 1]} : vector<1x384xf32> to vector<1x128xf32>
    %77 = arith.mulf %76, %60 : vector<1x128xf32>
    %78 = vector.extract_strided_slice %74 {offsets = [0, 0], sizes = [1, 128], strides = [1, 1]} : vector<1x384xf32> to vector<1x128xf32>
    %79 = arith.mulf %78, %75 : vector<1x128xf32>
    %80 = arith.addf %77, %79 : vector<1x128xf32>
    %81 = vector.extract_strided_slice %74 {offsets = [0, 256], sizes = [1, 128], strides = [1, 1]} : vector<1x384xf32> to vector<1x128xf32>
    %82 = math.tanh %80 : vector<1x128xf32>
    %83 = arith.mulf %81, %82 : vector<1x128xf32>
    %84 = vector.extract_strided_slice %23 {offsets = [3, 0], sizes = [1, 512], strides = [1, 1]} : vector<8x512xf32> to vector<1x512xf32>
    %85 = arith.truncf %83 : vector<1x128xf32> to vector<1x128xbf16>
    %c0_35 = arith.constant 0 : index
    %c0_36 = arith.constant 0 : index
    %86 = vector.load %arg5[%c0_35, %c0_36] : memref<128x512xbf16, #tpu.memory_space<vmem>>, vector<128x512xbf16>
    %cst_37 = arith.constant dense<0.000000e+00> : vector<1x512xf32>
    %87 = tpu.matmul %85, %86, %cst_37 {dimension_numbers = #tpu.dot_dimension_numbers<[1], [0], [0], [1], [0, 0, 1, 1], [], []>} : vector<1x128xbf16>, vector<128x512xbf16>, vector<1x512xf32> -> vector<1x512xf32>
    %88 = arith.addf %84, %87 : vector<1x512xf32>
    %89 = math.tanh %88 : vector<1x512xf32>
    %90 = vector.extract_strided_slice %89 {offsets = [0, 0], sizes = [1, 384], strides = [1, 1]} : vector<1x512xf32> to vector<1x384xf32>
    %cst_38 = arith.constant 5.000000e-01 : f32
    %91 = vector.broadcast %cst_38 : f32 to vector<1x384xf32>
    %92 = arith.mulf %91, %90 : vector<1x384xf32>
    %cst_39 = arith.constant 5.000000e-01 : f32
    %93 = vector.broadcast %cst_39 : f32 to vector<1x384xf32>
    %94 = arith.addf %92, %93 : vector<1x384xf32>
    %95 = vector.extract_strided_slice %89 {offsets = [0, 384], sizes = [1, 128], strides = [1, 1]} : vector<1x512xf32> to vector<1x128xf32>
    %96 = vector.extract_strided_slice %94 {offsets = [0, 128], sizes = [1, 128], strides = [1, 1]} : vector<1x384xf32> to vector<1x128xf32>
    %97 = arith.mulf %96, %80 : vector<1x128xf32>
    %98 = vector.extract_strided_slice %94 {offsets = [0, 0], sizes = [1, 128], strides = [1, 1]} : vector<1x384xf32> to vector<1x128xf32>
    %99 = arith.mulf %98, %95 : vector<1x128xf32>
    %100 = arith.addf %97, %99 : vector<1x128xf32>
    %101 = vector.extract_strided_slice %94 {offsets = [0, 256], sizes = [1, 128], strides = [1, 1]} : vector<1x384xf32> to vector<1x128xf32>
    %102 = math.tanh %100 : vector<1x128xf32>
    %103 = arith.mulf %101, %102 : vector<1x128xf32>
    %104 = vector.extract_strided_slice %23 {offsets = [4, 0], sizes = [1, 512], strides = [1, 1]} : vector<8x512xf32> to vector<1x512xf32>
    %105 = arith.truncf %103 : vector<1x128xf32> to vector<1x128xbf16>
    %c0_40 = arith.constant 0 : index
    %c0_41 = arith.constant 0 : index
    %106 = vector.load %arg5[%c0_40, %c0_41] : memref<128x512xbf16, #tpu.memory_space<vmem>>, vector<128x512xbf16>
    %cst_42 = arith.constant dense<0.000000e+00> : vector<1x512xf32>
    %107 = tpu.matmul %105, %106, %cst_42 {dimension_numbers = #tpu.dot_dimension_numbers<[1], [0], [0], [1], [0, 0, 1, 1], [], []>} : vector<1x128xbf16>, vector<128x512xbf16>, vector<1x512xf32> -> vector<1x512xf32>
    %108 = arith.addf %104, %107 : vector<1x512xf32>
    %109 = math.tanh %108 : vector<1x512xf32>
    %110 = vector.extract_strided_slice %109 {offsets = [0, 0], sizes = [1, 384], strides = [1, 1]} : vector<1x512xf32> to vector<1x384xf32>
    %cst_43 = arith.constant 5.000000e-01 : f32
    %111 = vector.broadcast %cst_43 : f32 to vector<1x384xf32>
    %112 = arith.mulf %111, %110 : vector<1x384xf32>
    %cst_44 = arith.constant 5.000000e-01 : f32
    %113 = vector.broadcast %cst_44 : f32 to vector<1x384xf32>
    %114 = arith.addf %112, %113 : vector<1x384xf32>
    %115 = vector.extract_strided_slice %109 {offsets = [0, 384], sizes = [1, 128], strides = [1, 1]} : vector<1x512xf32> to vector<1x128xf32>
    %116 = vector.extract_strided_slice %114 {offsets = [0, 128], sizes = [1, 128], strides = [1, 1]} : vector<1x384xf32> to vector<1x128xf32>
    %117 = arith.mulf %116, %100 : vector<1x128xf32>
    %118 = vector.extract_strided_slice %114 {offsets = [0, 0], sizes = [1, 128], strides = [1, 1]} : vector<1x384xf32> to vector<1x128xf32>
    %119 = arith.mulf %118, %115 : vector<1x128xf32>
    %120 = arith.addf %117, %119 : vector<1x128xf32>
    %121 = vector.extract_strided_slice %114 {offsets = [0, 256], sizes = [1, 128], strides = [1, 1]} : vector<1x384xf32> to vector<1x128xf32>
    %122 = math.tanh %120 : vector<1x128xf32>
    %123 = arith.mulf %121, %122 : vector<1x128xf32>
    %124 = vector.extract_strided_slice %23 {offsets = [5, 0], sizes = [1, 512], strides = [1, 1]} : vector<8x512xf32> to vector<1x512xf32>
    %125 = arith.truncf %123 : vector<1x128xf32> to vector<1x128xbf16>
    %c0_45 = arith.constant 0 : index
    %c0_46 = arith.constant 0 : index
    %126 = vector.load %arg5[%c0_45, %c0_46] : memref<128x512xbf16, #tpu.memory_space<vmem>>, vector<128x512xbf16>
    %cst_47 = arith.constant dense<0.000000e+00> : vector<1x512xf32>
    %127 = tpu.matmul %125, %126, %cst_47 {dimension_numbers = #tpu.dot_dimension_numbers<[1], [0], [0], [1], [0, 0, 1, 1], [], []>} : vector<1x128xbf16>, vector<128x512xbf16>, vector<1x512xf32> -> vector<1x512xf32>
    %128 = arith.addf %124, %127 : vector<1x512xf32>
    %129 = math.tanh %128 : vector<1x512xf32>
    %130 = vector.extract_strided_slice %129 {offsets = [0, 0], sizes = [1, 384], strides = [1, 1]} : vector<1x512xf32> to vector<1x384xf32>
    %cst_48 = arith.constant 5.000000e-01 : f32
    %131 = vector.broadcast %cst_48 : f32 to vector<1x384xf32>
    %132 = arith.mulf %131, %130 : vector<1x384xf32>
    %cst_49 = arith.constant 5.000000e-01 : f32
    %133 = vector.broadcast %cst_49 : f32 to vector<1x384xf32>
    %134 = arith.addf %132, %133 : vector<1x384xf32>
    %135 = vector.extract_strided_slice %129 {offsets = [0, 384], sizes = [1, 128], strides = [1, 1]} : vector<1x512xf32> to vector<1x128xf32>
    %136 = vector.extract_strided_slice %134 {offsets = [0, 128], sizes = [1, 128], strides = [1, 1]} : vector<1x384xf32> to vector<1x128xf32>
    %137 = arith.mulf %136, %120 : vector<1x128xf32>
    %138 = vector.extract_strided_slice %134 {offsets = [0, 0], sizes = [1, 128], strides = [1, 1]} : vector<1x384xf32> to vector<1x128xf32>
    %139 = arith.mulf %138, %135 : vector<1x128xf32>
    %140 = arith.addf %137, %139 : vector<1x128xf32>
    %141 = vector.extract_strided_slice %134 {offsets = [0, 256], sizes = [1, 128], strides = [1, 1]} : vector<1x384xf32> to vector<1x128xf32>
    %142 = math.tanh %140 : vector<1x128xf32>
    %143 = arith.mulf %141, %142 : vector<1x128xf32>
    %144 = vector.extract_strided_slice %23 {offsets = [6, 0], sizes = [1, 512], strides = [1, 1]} : vector<8x512xf32> to vector<1x512xf32>
    %145 = arith.truncf %143 : vector<1x128xf32> to vector<1x128xbf16>
    %c0_50 = arith.constant 0 : index
    %c0_51 = arith.constant 0 : index
    %146 = vector.load %arg5[%c0_50, %c0_51] : memref<128x512xbf16, #tpu.memory_space<vmem>>, vector<128x512xbf16>
    %cst_52 = arith.constant dense<0.000000e+00> : vector<1x512xf32>
    %147 = tpu.matmul %145, %146, %cst_52 {dimension_numbers = #tpu.dot_dimension_numbers<[1], [0], [0], [1], [0, 0, 1, 1], [], []>} : vector<1x128xbf16>, vector<128x512xbf16>, vector<1x512xf32> -> vector<1x512xf32>
    %148 = arith.addf %144, %147 : vector<1x512xf32>
    %149 = math.tanh %148 : vector<1x512xf32>
    %150 = vector.extract_strided_slice %149 {offsets = [0, 0], sizes = [1, 384], strides = [1, 1]} : vector<1x512xf32> to vector<1x384xf32>
    %cst_53 = arith.constant 5.000000e-01 : f32
    %151 = vector.broadcast %cst_53 : f32 to vector<1x384xf32>
    %152 = arith.mulf %151, %150 : vector<1x384xf32>
    %cst_54 = arith.constant 5.000000e-01 : f32
    %153 = vector.broadcast %cst_54 : f32 to vector<1x384xf32>
    %154 = arith.addf %152, %153 : vector<1x384xf32>
    %155 = vector.extract_strided_slice %149 {offsets = [0, 384], sizes = [1, 128], strides = [1, 1]} : vector<1x512xf32> to vector<1x128xf32>
    %156 = vector.extract_strided_slice %154 {offsets = [0, 128], sizes = [1, 128], strides = [1, 1]} : vector<1x384xf32> to vector<1x128xf32>
    %157 = arith.mulf %156, %140 : vector<1x128xf32>
    %158 = vector.extract_strided_slice %154 {offsets = [0, 0], sizes = [1, 128], strides = [1, 1]} : vector<1x384xf32> to vector<1x128xf32>
    %159 = arith.mulf %158, %155 : vector<1x128xf32>
    %160 = arith.addf %157, %159 : vector<1x128xf32>
    %161 = vector.extract_strided_slice %154 {offsets = [0, 256], sizes = [1, 128], strides = [1, 1]} : vector<1x384xf32> to vector<1x128xf32>
    %162 = math.tanh %160 : vector<1x128xf32>
    %163 = arith.mulf %161, %162 : vector<1x128xf32>
    %164 = vector.extract_strided_slice %23 {offsets = [7, 0], sizes = [1, 512], strides = [1, 1]} : vector<8x512xf32> to vector<1x512xf32>
    %165 = arith.truncf %163 : vector<1x128xf32> to vector<1x128xbf16>
    %c0_55 = arith.constant 0 : index
    %c0_56 = arith.constant 0 : index
    %166 = vector.load %arg5[%c0_55, %c0_56] : memref<128x512xbf16, #tpu.memory_space<vmem>>, vector<128x512xbf16>
    %cst_57 = arith.constant dense<0.000000e+00> : vector<1x512xf32>
    %167 = tpu.matmul %165, %166, %cst_57 {dimension_numbers = #tpu.dot_dimension_numbers<[1], [0], [0], [1], [0, 0, 1, 1], [], []>} : vector<1x128xbf16>, vector<128x512xbf16>, vector<1x512xf32> -> vector<1x512xf32>
    %168 = arith.addf %164, %167 : vector<1x512xf32>
    %169 = math.tanh %168 : vector<1x512xf32>
    %170 = vector.extract_strided_slice %169 {offsets = [0, 0], sizes = [1, 384], strides = [1, 1]} : vector<1x512xf32> to vector<1x384xf32>
    %cst_58 = arith.constant 5.000000e-01 : f32
    %171 = vector.broadcast %cst_58 : f32 to vector<1x384xf32>
    %172 = arith.mulf %171, %170 : vector<1x384xf32>
    %cst_59 = arith.constant 5.000000e-01 : f32
    %173 = vector.broadcast %cst_59 : f32 to vector<1x384xf32>
    %174 = arith.addf %172, %173 : vector<1x384xf32>
    %175 = vector.extract_strided_slice %169 {offsets = [0, 384], sizes = [1, 128], strides = [1, 1]} : vector<1x512xf32> to vector<1x128xf32>
    %176 = vector.extract_strided_slice %174 {offsets = [0, 128], sizes = [1, 128], strides = [1, 1]} : vector<1x384xf32> to vector<1x128xf32>
    %177 = arith.mulf %176, %160 : vector<1x128xf32>
    %178 = vector.extract_strided_slice %174 {offsets = [0, 0], sizes = [1, 128], strides = [1, 1]} : vector<1x384xf32> to vector<1x128xf32>
    %179 = arith.mulf %178, %175 : vector<1x128xf32>
    %180 = arith.addf %177, %179 : vector<1x128xf32>
    %181 = vector.extract_strided_slice %174 {offsets = [0, 256], sizes = [1, 128], strides = [1, 1]} : vector<1x384xf32> to vector<1x128xf32>
    %182 = math.tanh %180 : vector<1x128xf32>
    %183 = arith.mulf %181, %182 : vector<1x128xf32>
    %184 = tpu.concatenate %43, %63, %83, %103, %123, %143, %163, %183 in 0 : vector<1x128xf32>, vector<1x128xf32>, vector<1x128xf32>, vector<1x128xf32>, vector<1x128xf32>, vector<1x128xf32>, vector<1x128xf32>, vector<1x128xf32> -> vector<8x128xf32>
    %cst_60 = arith.constant 0.000000e+00 : f32
    %185 = vector.broadcast %cst_60 : f32 to vector<8x128xf32>
    %186 = arith.maximumf %184, %185 : vector<8x128xf32>
    %187 = arith.truncf %186 : vector<8x128xf32> to vector<8x128xbf16>
    %c0_61 = arith.constant 0 : index
    %c0_62 = arith.constant 0 : index
    %188 = vector.load %arg7[%c0_61, %c0_62] : memref<128x128xbf16, #tpu.memory_space<vmem>>, vector<128x128xbf16>
    %cst_63 = arith.constant dense<0.000000e+00> : vector<8x128xf32>
    %189 = tpu.matmul %187, %188, %cst_63 {dimension_numbers = #tpu.dot_dimension_numbers<[1], [0], [0], [1], [0, 0, 1, 1], [], []>} : vector<8x128xbf16>, vector<128x128xbf16>, vector<8x128xf32> -> vector<8x128xf32>
    %c0_64 = arith.constant 0 : index
    %c0_65 = arith.constant 0 : index
    %190 = vector.load %arg8[%c0_64, %c0_65] : memref<1x128xf32, #tpu.memory_space<vmem>>, vector<1x128xf32>
    %191 = vector.broadcast %190 : vector<1x128xf32> to vector<8x128xf32>
    %192 = arith.addf %189, %191 : vector<8x128xf32>
    %193 = arith.index_cast %21 : i32 to index
    %c0_66 = arith.constant 0 : index
    %194 = vector.load %arg9[%193, %c0_66] : memref<8x128xf32, #tpu.memory_space<vmem>>, vector<8x128xf32>
    tpu.vector_store %arg9[%193, %c0_66], %192 {strides = array<i32>} : memref<8x128xf32, #tpu.memory_space<vmem>>, vector<8x128xf32>,
    %c1_i32 = arith.constant 1 : i32
    %c0_67 = arith.constant 0 : index
    %c0_68 = arith.constant 0 : index
    %195 = vector.load %arg11[%c0_67, %c0_68] : memref<1x128xf32, #tpu.memory_space<vmem>>, vector<1x128xf32>
    tpu.vector_store %arg11[%c0_67, %c0_68], %183 {strides = array<i32>} : memref<1x128xf32, #tpu.memory_space<vmem>>, vector<1x128xf32>,
    %c0_69 = arith.constant 0 : index
    %c0_70 = arith.constant 0 : index
    %196 = vector.load %arg12[%c0_69, %c0_70] : memref<1x128xf32, #tpu.memory_space<vmem>>, vector<1x128xf32>
    tpu.vector_store %arg12[%c0_69, %c0_70], %180 {strides = array<i32>} : memref<1x128xf32, #tpu.memory_space<vmem>>, vector<1x128xf32>,
    return
  }
  func.func @transform_0(%arg0: i32) -> (i32, i32) {
    %c0_i32 = arith.constant 0 : i32
    %c0_i32_0 = arith.constant 0 : i32
    return %arg0, %c0_i32 : i32, i32
  }
  func.func @transform_1(%arg0: i32) -> (i32, i32) {
    %c0_i32 = arith.constant 0 : i32
    %c0_i32_0 = arith.constant 0 : i32
    %c0_i32_1 = arith.constant 0 : i32
    return %c0_i32, %c0_i32_0 : i32, i32
  }
  func.func @transform_2(%arg0: i32) -> (i32, i32) {
    %c0_i32 = arith.constant 0 : i32
    %c0_i32_0 = arith.constant 0 : i32
    %c0_i32_1 = arith.constant 0 : i32
    return %c0_i32, %c0_i32_0 : i32, i32
  }
  func.func @transform_3(%arg0: i32) -> (i32, i32) {
    %c0_i32 = arith.constant 0 : i32
    %c0_i32_0 = arith.constant 0 : i32
    %c0_i32_1 = arith.constant 0 : i32
    return %c0_i32, %c0_i32_0 : i32, i32
  }
  func.func @transform_4(%arg0: i32) -> (i32, i32) {
    %c0_i32 = arith.constant 0 : i32
    %c0_i32_0 = arith.constant 0 : i32
    %c0_i32_1 = arith.constant 0 : i32
    return %c0_i32, %c0_i32_0 : i32, i32
  }
  func.func @transform_5(%arg0: i32) -> (i32, i32) {
    %c0_i32 = arith.constant 0 : i32
    %c0_i32_0 = arith.constant 0 : i32
    %c0_i32_1 = arith.constant 0 : i32
    return %c0_i32, %c0_i32_0 : i32, i32
  }
  func.func @transform_6(%arg0: i32) -> (i32, i32) {
    %c0_i32 = arith.constant 0 : i32
    %c0_i32_0 = arith.constant 0 : i32
    %c0_i32_1 = arith.constant 0 : i32
    return %c0_i32, %c0_i32_0 : i32, i32
  }
  func.func @transform_7(%arg0: i32) -> (i32, i32) {
    %c0_i32 = arith.constant 0 : i32
    %c0_i32_0 = arith.constant 0 : i32
    %c0_i32_1 = arith.constant 0 : i32
    return %c0_i32, %c0_i32_0 : i32, i32
  }
  func.func @transform_8(%arg0: i32) -> (i32, i32) {
    %c0_i32 = arith.constant 0 : i32
    %c0_i32_0 = arith.constant 0 : i32
    return %arg0, %c0_i32 : i32, i32
  }
}

</mosaic_0001>

<llo_original>
// kernel: aq_network_logits.1
$region0: #{aq_network_logits.1}
  #allocation0 [shape = 'u32[]', space=smem, size = 0x4, offset = 0x4, fixed_abs, tag = 'smem constant byte address 0x4 - core index']
  #allocation1 [shape = 'u32[72,128]{1,0:T(1,128)}', space=vmem, size = 0x9000, scoped, tag = 'internal scratch']
  #allocation2 [shape = 'f32[8,512]{1,0:T(8,128)}', space=vmem, size = 0x4000, scoped, tag = 'scratch operand']
  #allocation3 [shape = 'f32[1,128]{1,0:T(1,128)}', space=vmem, size = 0x200, scoped, tag = 'scratch operand']
  #allocation4 [shape = 'f32[1,128]{1,0:T(1,128)}', space=vmem, size = 0x200, scoped, tag = 'scratch operand']
  %s0 = inlined_call_operand.vmem [shape: bf16[8,128], index: 0, kind: input, shape index: {}]
  %s1 = inlined_call_operand.hbm [shape: bf16[128,384], index: 1, kind: input, shape index: {}]
  %s2 = inlined_call_operand.vmem [shape: f32[1,384], index: 2, kind: input, shape index: {}]
  %s3 = inlined_call_operand.hbm [shape: bf16[384,512], index: 3, kind: input, shape index: {}]
  %s4 = inlined_call_operand.hbm [shape: bf16[128,512], index: 4, kind: input, shape index: {}]
  %s5 = inlined_call_operand.vmem [shape: f32[1,512], index: 5, kind: input, shape index: {}]
  %s6 = inlined_call_operand.hbm [shape: bf16[128,128], index: 6, kind: input, shape index: {}]
  %s7 = inlined_call_operand.vmem [shape: f32[1,128], index: 7, kind: input, shape index: {}]
  %s8 = inlined_call_operand.vmem [shape: f32[8,128], index: 8, kind: output, shape index: {}]
  %s9 = sld [smem:[#allocation0]]
  $region62: #{aq_network_logits.1} parent=0
    _
  %s11 = ssub.s32 1, %s9
  %s12 = scalar_select 0, %s11, %s9
  $region1: #{aq_network_logits.1} parent=0
    #allocation5 [shape = 'u8[98304]{0}', space=vmem, size = 0x18000, scoped, tag = 'input window, operand 1, single buffered']
    #allocation6 [shape = 's32[1]{0}', space=sflag, size = 0x4, scoped, tag = 'scoped memory for aq_network_logits.1']
    #allocation7 [shape = 'u8[393216]{0}', space=vmem, size = 0x60000, scoped, tag = 'input window, operand 3, single buffered']
    #allocation8 [shape = 's32[1]{0}', space=sflag, size = 0x4, scoped, tag = 'scoped memory for aq_network_logits.1']
    #allocation9 [shape = 'u8[131072]{0}', space=vmem, size = 0x20000, scoped, tag = 'input window, operand 4, single buffered']
    #allocation10 [shape = 'u8[32768]{0}', space=vmem, size = 0x8000, scoped, tag = 'input window, operand 6, single buffered']
    #allocation11 [shape = 's32[1]{0}', space=sflag, size = 0x4, scoped, tag = 'scoped memory for aq_network_logits.1']
    %13 = vsyncpa [#allocation6], 0
    %14 = vsyncpa [#allocation8], 0
    %15 = vsyncpa [#allocation11], 0
    // Predicated region
    $region2: #{aq_network_logits.1} parent=1 // pred_check
      _
    $region3: #{aq_network_logits.1} parent=1 // pred_check_branch
      %17 = sbr.rel (0) target = $region5
    $region4: #{aq_network_logits.1} parent=1 // pred_region
      _
    $region5: #{aq_network_logits.1} parent=1 // pred_fallthru
      _
    // Predicated region
    $region6: #{aq_network_logits.1} parent=1 // pred_check
      _
    $region7: #{aq_network_logits.1} parent=1 // pred_check_branch
      %19 = sbr.rel (0) target = $region9
    $region8: #{aq_network_logits.1} parent=1 // pred_region
      %21 = vsyncadd [#allocation6], 0
      %s22 = sshll.u32 %s1, 4
      %s23 = int_to_ptr.hbm [resolvable:$true] %s22
      %s24 = sshll.u32 [#allocation5], 4
      %s25 = int_to_ptr.vmem [resolvable:$true] %s24
      %30 = dma.hbm_to_vmem [thread:$0]  %s23, 3072, %s25, [#allocation6], 192, 192, 12
    $region9: #{aq_network_logits.1} parent=1 // pred_fallthru
      _
    // Predicated region
    $region10: #{aq_network_logits.1} parent=1 // pred_check
      _
    $region11: #{aq_network_logits.1} parent=1 // pred_check_branch
      %32 = sbr.rel (0) target = $region13
    $region12: #{aq_network_logits.1} parent=1 // pred_region
      _
    $region13: #{aq_network_logits.1} parent=1 // pred_fallthru
      _
    // Predicated region
    $region14: #{aq_network_logits.1} parent=1 // pred_check
      _
    $region15: #{aq_network_logits.1} parent=1 // pred_check_branch
      %34 = sbr.rel (0) target = $region17
    $region16: #{aq_network_logits.1} parent=1 // pred_region
      %36 = vsyncadd [#allocation8], 0
      %s37 = sshll.u32 %s3, 4
      %s38 = int_to_ptr.hbm [resolvable:$true] %s37
      %s39 = sshll.u32 [#allocation7], 4
      %s40 = int_to_ptr.vmem [resolvable:$true] %s39
      %45 = dma.hbm_to_vmem [thread:$0]  %s38, 12288, %s40, [#allocation8], 256, 256, 16
    $region17: #{aq_network_logits.1} parent=1 // pred_fallthru
      _
    // Predicated region
    $region18: #{aq_network_logits.1} parent=1 // pred_check
      _
    $region19: #{aq_network_logits.1} parent=1 // pred_check_branch
      %47 = sbr.rel (0) target = $region21
    $region20: #{aq_network_logits.1} parent=1 // pred_region
      %49 = vsyncadd [#allocation8], 0
      %s50 = sshll.u32 %s4, 4
      %s51 = int_to_ptr.hbm [resolvable:$true] %s50
      %s52 = sshll.u32 [#allocation9], 4
      %s53 = int_to_ptr.vmem [resolvable:$true] %s52
      %58 = dma.hbm_to_vmem [thread:$0]  %s51, 4096, %s53, [#allocation8], 256, 256, 16
    $region21: #{aq_network_logits.1} parent=1 // pred_fallthru
      _
    // Predicated region
    $region22: #{aq_network_logits.1} parent=1 // pred_check
      _
    $region23: #{aq_network_logits.1} parent=1 // pred_check_branch
      %60 = sbr.rel (0) target = $region25
    $region24: #{aq_network_logits.1} parent=1 // pred_region
      _
    $region25: #{aq_network_logits.1} parent=1 // pred_fallthru
      _
    // Predicated region
    $region26: #{aq_network_logits.1} parent=1 // pred_check
      _
    $region27: #{aq_network_logits.1} parent=1 // pred_check_branch
      %62 = sbr.rel (0) target = $region29
    $region28: #{aq_network_logits.1} parent=1 // pred_region
      %64 = vsyncadd [#allocation11], 0
      %s65 = sshll.u32 %s6, 4
      %s66 = int_to_ptr.hbm [resolvable:$true] %s65
      %s67 = sshll.u32 [#allocation10], 4
      %s68 = int_to_ptr.vmem [resolvable:$true] %s67
      %73 = dma.hbm_to_vmem [thread:$0]  %s66, 1024, %s68, [#allocation11], 64, 64, 4
    $region29: #{aq_network_logits.1} parent=1 // pred_fallthru
      _
    // Predicated region
    $region30: #{aq_network_logits.1} parent=1 // pred_check
      _
    $region31: #{aq_network_logits.1} parent=1 // pred_check_branch
      %75 = sbr.rel (0) target = $region33
    $region32: #{aq_network_logits.1} parent=1 // pred_region
      _
    $region33: #{aq_network_logits.1} parent=1 // pred_fallthru
      _
    // Predicated region
    $region34: #{aq_network_logits.1} parent=1 // pred_check
      _
    $region35: #{aq_network_logits.1} parent=1 // pred_check_branch
      %77 = sbr.rel (0) target = $region37
    $region36: #{aq_network_logits.1} parent=1 // pred_region
      %79 = dma.done [#allocation6], 3072
    $region37: #{aq_network_logits.1} parent=1 // pred_fallthru
      _
    // Predicated region
    $region38: #{aq_network_logits.1} parent=1 // pred_check
      _
    $region39: #{aq_network_logits.1} parent=1 // pred_check_branch
      %81 = sbr.rel (0) target = $region41
    $region40: #{aq_network_logits.1} parent=1 // pred_region
      %83 = dma.done [#allocation8], 12288
    $region41: #{aq_network_logits.1} parent=1 // pred_fallthru
      _
    // Predicated region
    $region42: #{aq_network_logits.1} parent=1 // pred_check
      _
    $region43: #{aq_network_logits.1} parent=1 // pred_check_branch
      %85 = sbr.rel (0) target = $region45
    $region44: #{aq_network_logits.1} parent=1 // pred_region
      %87 = dma.done [#allocation8], 4096
    $region45: #{aq_network_logits.1} parent=1 // pred_fallthru
      _
    // Predicated region
    $region46: #{aq_network_logits.1} parent=1 // pred_check
      _
    $region47: #{aq_network_logits.1} parent=1 // pred_check_branch
      %89 = sbr.rel (0) target = $region49
    $region48: #{aq_network_logits.1} parent=1 // pred_region
      %91 = dma.done [#allocation11], 1024
    $region49: #{aq_network_logits.1} parent=1 // pred_fallthru
      _
    %p92 = scmp.eq.s32.totalorder 0, 0
    // Predicated region
    $region50: #{aq_network_logits.1} parent=1 // pred_check
      %p93 = pneg %p92
    $region51: #{aq_network_logits.1} parent=1 // pred_check_branch
      %95 = sbr.rel (%p93) target = $region53
    $region52: #{aq_network_logits.1} parent=1 // pred_region
      %96 = vst [vmem:[#allocation3] sm:$0x1] 0.0
      %97 = vst [vmem:[#allocation4] sm:$0x1] 0.0
    $region53: #{aq_network_logits.1} parent=1 // pred_fallthru
      _
    %v98 = vld [vmem:[%s0] sm:$0xf]
    %v99 = vld [vmem:[#allocation5] sm:$0xff]
    %v100 = vld [vmem:[#allocation5 + $0x8] sm:$0xf]
    %v101 = vld [vmem:[#allocation5 + $0xc] sm:$0xff]
    %v102 = vld [vmem:[#allocation5 + $0x14] sm:$0xf]
    %v103 = vld [vmem:[#allocation5 + $0x18] sm:$0xff]
    %v104 = vld [vmem:[#allocation5 + $0x20] sm:$0xf]
    %v105 = vld [vmem:[#allocation5 + $0x24] sm:$0xff]
    %v106 = vld [vmem:[#allocation5 + $0x2c] sm:$0xf]
    %v107 = vld [vmem:[#allocation5 + $0x30] sm:$0xff]
    %v108 = vld [vmem:[#allocation5 + $0x38] sm:$0xf]
    %v109 = vld [vmem:[#allocation5 + $0x3c] sm:$0xff]
    %v110 = vld [vmem:[#allocation5 + $0x44] sm:$0xf]
    %v111 = vld [vmem:[#allocation5 + $0x48] sm:$0xff]
    %v112 = vld [vmem:[#allocation5 + $0x50] sm:$0xf]
    %v113 = vld [vmem:[#allocation5 + $0x54] sm:$0xff]
    %v114 = vld [vmem:[#allocation5 + $0x5c] sm:$0xf]
    %v115 = vld [vmem:[#allocation5 + $0x60] sm:$0xff]
    %v116 = vld [vmem:[#allocation5 + $0x68] sm:$0xf]
    %v117 = vld [vmem:[#allocation5 + $0x6c] sm:$0xff]
    %v118 = vld [vmem:[#allocation5 + $0x74] sm:$0xf]
    %v119 = vld [vmem:[#allocation5 + $0x78] sm:$0xff]
    %v120 = vld [vmem:[#allocation5 + $0x80] sm:$0xf]
    %v121 = vld [vmem:[#allocation5 + $0x84] sm:$0xff]
    %v122 = vld [vmem:[#allocation5 + $0x8c] sm:$0xf]
    %v123 = vld [vmem:[#allocation5 + $0x90] sm:$0xff]
    %v124 = vld [vmem:[#allocation5 + $0x98] sm:$0xf]
    %v125 = vld [vmem:[#allocation5 + $0x9c] sm:$0xff]
    %v126 = vld [vmem:[#allocation5 + $0xa4] sm:$0xf]
    %v127 = vld [vmem:[#allocation5 + $0xa8] sm:$0xff]
    %v128 = vld [vmem:[#allocation5 + $0xb0] sm:$0xf]
    %v129 = vld [vmem:[#allocation5 + $0xb4] sm:$0xff]
    %v130 = vld [vmem:[#allocation5 + $0xbc] sm:$0xf]
    %v131 = vld [vmem:[%s2] sm:$0x7]
    %v133 = vperm.slane %v131, 0
    %v134 = vperm.slane %v131, 1
    %v135 = vperm.slane %v131, 2
    %v171 = vunpack.c.l.b16 %v99
    %v172 = vunpack.c.h.b16 %v99
    %v173 = vunpack.c.l.b16 %v100
    %v174 = vunpack.c.l.b16 %v101
    %v175 = vunpack.c.h.b16 %v101
    %v176 = vunpack.c.l.b16 %v102
    %v177 = vunpack.c.l.b16 %v103
    %v178 = vunpack.c.h.b16 %v103
    %v179 = vunpack.c.l.b16 %v104
    %v180 = vunpack.c.l.b16 %v105
    %v181 = vunpack.c.h.b16 %v105
    %v182 = vunpack.c.l.b16 %v106
    %v183 = vunpack.c.l.b16 %v107
    %v184 = vunpack.c.h.b16 %v107
    %v185 = vunpack.c.l.b16 %v108
    %v186 = vunpack.c.l.b16 %v109
    %v187 = vunpack.c.h.b16 %v109
    %v188 = vunpack.c.l.b16 %v110
    %v189 = vunpack.c.l.b16 %v111
    %v190 = vunpack.c.h.b16 %v111
    %v191 = vunpack.c.l.b16 %v112
    %v192 = vunpack.c.l.b16 %v113
    %v193 = vunpack.c.h.b16 %v113
    %v194 = vunpack.c.l.b16 %v114
    %v195 = vunpack.c.l.b16 %v115
    %v196 = vunpack.c.h.b16 %v115
    %v197 = vunpack.c.l.b16 %v116
    %v198 = vunpack.c.l.b16 %v117
    %v199 = vunpack.c.h.b16 %v117
    %v200 = vunpack.c.l.b16 %v118
    %v201 = vunpack.c.l.b16 %v119
    %v202 = vunpack.c.h.b16 %v119
    %v203 = vunpack.c.l.b16 %v120
    %v204 = vunpack.c.l.b16 %v121
    %v205 = vunpack.c.h.b16 %v121
    %v206 = vunpack.c.l.b16 %v122
    %v207 = vunpack.c.l.b16 %v123
    %v208 = vunpack.c.h.b16 %v123
    %v209 = vunpack.c.l.b16 %v124
    %v210 = vunpack.c.l.b16 %v125
    %v211 = vunpack.c.h.b16 %v125
    %v212 = vunpack.c.l.b16 %v126
    %v213 = vunpack.c.l.b16 %v127
    %v214 = vunpack.c.h.b16 %v127
    %v215 = vunpack.c.l.b16 %v128
    %v216 = vunpack.c.l.b16 %v129
    %v217 = vunpack.c.h.b16 %v129
    %v218 = vunpack.c.l.b16 %v130
    %v219 = vpack.c.b16 %v174, %v171
    %v220 = vpack.c.b16 %v175, %v172
    %v221 = vpack.c.b16 %v176, %v173
    %v222 = vpack.c.b16 %v180, %v177
    %v223 = vpack.c.b16 %v181, %v178
    %v224 = vpack.c.b16 %v182, %v179
    %v225 = vpack.c.b16 %v186, %v183
    %v226 = vpack.c.b16 %v187, %v184
    %v227 = vpack.c.b16 %v188, %v185
    %v228 = vpack.c.b16 %v192, %v189
    %v229 = vpack.c.b16 %v193, %v190
    %v230 = vpack.c.b16 %v194, %v191
    %v231 = vpack.c.b16 %v198, %v195
    %v232 = vpack.c.b16 %v199, %v196
    %v233 = vpack.c.b16 %v200, %v197
    %v234 = vpack.c.b16 %v204, %v201
    %v235 = vpack.c.b16 %v205, %v202
    %v236 = vpack.c.b16 %v206, %v203
    %v237 = vpack.c.b16 %v210, %v207
    %v238 = vpack.c.b16 %v211, %v208
    %v239 = vpack.c.b16 %v212, %v209
    %v240 = vpack.c.b16 %v216, %v213
    %v241 = vpack.c.b16 %v217, %v214
    %v242 = vpack.c.b16 %v218, %v215
    %267 = vmatpush.bf16.msra.mxu0 %v240
    %268 = vmatpush.bf16.msra.mxu0 %v237
    %269 = vmatpush.bf16.msra.mxu0 %v234
    %270 = vmatpush.bf16.msra.mxu0 %v231
    %271 = vmatpush.bf16.msra.mxu0 %v228
    %272 = vmatpush.bf16.msra.mxu0 %v225
    %273 = vmatpush.bf16.msra.mxu0 %v222
    %274 = vmatpush.bf16.msra.mxu0 %v219
    %275 = vmatmul.bf16.gmra.mxu0 %v98
    %v276 = vpop.f32.mrf.mxu0
    %v277 = vadd.f32 %v133, %v276
    %v278 = vpop.f32.mrf.mxu0
    %279 = vdwg.mxu0
    %280 = vmatpush.bf16.msra.mxu0 %v241
    %281 = vmatpush.bf16.msra.mxu0 %v238
    %282 = vmatpush.bf16.msra.mxu0 %v235
    %283 = vmatpush.bf16.msra.mxu0 %v232
    %284 = vmatpush.bf16.msra.mxu0 %v229
    %285 = vmatpush.bf16.msra.mxu0 %v226
    %286 = vmatpush.bf16.msra.mxu0 %v223
    %287 = vmatpush.bf16.msra.mxu0 %v220
    %288 = vmatmul.bf16.gmra.mxu0 %v98
    %v289 = vpop.f32.mrf.mxu0
    %v290 = vadd.f32 %v134, %v289
    %v291 = vpop.f32.mrf.mxu0
    %292 = vdwg.mxu0
    %293 = vmatpush.bf16.msra.mxu0 %v242
    %294 = vmatpush.bf16.msra.mxu0 %v239
    %295 = vmatpush.bf16.msra.mxu0 %v236
    %296 = vmatpush.bf16.msra.mxu0 %v233
    %297 = vmatpush.bf16.msra.mxu0 %v230
    %298 = vmatpush.bf16.msra.mxu0 %v227
    %299 = vmatpush.bf16.msra.mxu0 %v224
    %300 = vmatpush.bf16.msra.mxu0 %v221
    %301 = vmatmul.bf16.gmra.mxu0 %v98
    %v302 = vpop.f32.mrf.mxu0
    %v303 = vadd.f32 %v135, %v302
    %v304 = vpop.f32.mrf.mxu0
    %305 = vdwg.mxu0
    %v306 = vmax.f32 %v277, 0.0
    %v307 = vmax.f32 %v290, 0.0
    %v308 = vmax.f32 %v303, 0.0
    %v309 = vpack.c.bf16 %v306, %v306
    %v310 = vpack.c.bf16 %v307, %v307
    %v311 = vpack.c.bf16 %v308, %v308
    %v312 = vld [vmem:[#allocation7] sm:$0xff]
    %v313 = vld [vmem:[#allocation7 + $0x8] sm:$0xff]
    %v314 = vld [vmem:[#allocation7 + $0x10] sm:$0xff]
    %v315 = vld [vmem:[#allocation7 + $0x18] sm:$0xff]
    %v316 = vld [vmem:[#allocation7 + $0x20] sm:$0xff]
    %v317 = vld [vmem:[#allocation7 + $0x28] sm:$0xff]
    %v318 = vld [vmem:[#allocation7 + $0x30] sm:$0xff]
    %v319 = vld [vmem:[#allocation7 + $0x38] sm:$0xff]
    %v320 = vld [vmem:[#allocation7 + $0x40] sm:$0xff]
    %v321 = vld [vmem:[#allocation7 + $0x48] sm:$0xff]
    %v322 = vld [vmem:[#allocation7 + $0x50] sm:$0xff]
    %v323 = vld [vmem:[#allocation7 + $0x58] sm:$0xff]
    %v324 = vld [vmem:[#allocation7 + $0x60] sm:$0xff]
    %v325 = vld [vmem:[#allocation7 + $0x68] sm:$0xff]
    %v326 = vld [vmem:[#allocation7 + $0x70] sm:$0xff]
    %v327 = vld [vmem:[#allocation7 + $0x78] sm:$0xff]
    %v328 = vld [vmem:[#allocation7 + $0x80] sm:$0xff]
    %v329 = vld [vmem:[#allocation7 + $0x88] sm:$0xff]
    %v330 = vld [vmem:[#allocation7 + $0x90] sm:$0xff]
    %v331 = vld [vmem:[#allocation7 + $0x98] sm:$0xff]
    %v332 = vld [vmem:[#allocation7 + $0xa0] sm:$0xff]
    %v333 = vld [vmem:[#allocation7 + $0xa8] sm:$0xff]
    %v334 = vld [vmem:[#allocation7 + $0xb0] sm:$0xff]
    %v335 = vld [vmem:[#allocation7 + $0xb8] sm:$0xff]
    %v336 = vld [vmem:[#allocation7 + $0xc0] sm:$0xff]
    %v337 = vld [vmem:[#allocation7 + $0xc8] sm:$0xff]
    %v338 = vld [vmem:[#allocation7 + $0xd0] sm:$0xff]
    %v339 = vld [vmem:[#allocation7 + $0xd8] sm:$0xff]
    %v340 = vld [vmem:[#allocation7 + $0xe0] sm:$0xff]
    %v341 = vld [vmem:[#allocation7 + $0xe8] sm:$0xff]
    %v342 = vld [vmem:[#allocation7 + $0xf0] sm:$0xff]
    %v343 = vld [vmem:[#allocation7 + $0xf8] sm:$0xff]
    %v344 = vld [vmem:[#allocation7 + $0x100] sm:$0xff]
    %v345 = vld [vmem:[#allocation7 + $0x108] sm:$0xff]
    %v346 = vld [vmem:[#allocation7 + $0x110] sm:$0xff]
    %v347 = vld [vmem:[#allocation7 + $0x118] sm:$0xff]
    %v348 = vld [vmem:[#allocation7 + $0x120] sm:$0xff]
    %v349 = vld [vmem:[#allocation7 + $0x128] sm:$0xff]
    %v350 = vld [vmem:[#allocation7 + $0x130] sm:$0xff]
    %v351 = vld [vmem:[#allocation7 + $0x138] sm:$0xff]
    %v352 = vld [vmem:[#allocation7 + $0x140] sm:$0xff]
    %v353 = vld [vmem:[#allocation7 + $0x148] sm:$0xff]
    %v354 = vld [vmem:[#allocation7 + $0x150] sm:$0xff]
    %v355 = vld [vmem:[#allocation7 + $0x158] sm:$0xff]
    %v356 = vld [vmem:[#allocation7 + $0x160] sm:$0xff]
    %v357 = vld [vmem:[#allocation7 + $0x168] sm:$0xff]
    %v358 = vld [vmem:[#allocation7 + $0x170] sm:$0xff]
    %v359 = vld [vmem:[#allocation7 + $0x178] sm:$0xff]
    %v360 = vld [vmem:[#allocation7 + $0x180] sm:$0xff]
    %v361 = vld [vmem:[#allocation7 + $0x188] sm:$0xff]
    %v362 = vld [vmem:[#allocation7 + $0x190] sm:$0xff]
    %v363 = vld [vmem:[#allocation7 + $0x198] sm:$0xff]
    %v364 = vld [vmem:[#allocation7 + $0x1a0] sm:$0xff]
    %v365 = vld [vmem:[#allocation7 + $0x1a8] sm:$0xff]
    %v366 = vld [vmem:[#allocation7 + $0x1b0] sm:$0xff]
    %v367 = vld [vmem:[#allocation7 + $0x1b8] sm:$0xff]
    %v368 = vld [vmem:[#allocation7 + $0x1c0] sm:$0xff]
    %v369 = vld [vmem:[#allocation7 + $0x1c8] sm:$0xff]
    %v370 = vld [vmem:[#allocation7 + $0x1d0] sm:$0xff]
    %v371 = vld [vmem:[#allocation7 + $0x1d8] sm:$0xff]
    %v372 = vld [vmem:[#allocation7 + $0x1e0] sm:$0xff]
    %v373 = vld [vmem:[#allocation7 + $0x1e8] sm:$0xff]
    %v374 = vld [vmem:[#allocation7 + $0x1f0] sm:$0xff]
    %v375 = vld [vmem:[#allocation7 + $0x1f8] sm:$0xff]
    %v376 = vld [vmem:[#allocation7 + $0x200] sm:$0xff]
    %v377 = vld [vmem:[#allocation7 + $0x208] sm:$0xff]
    %v378 = vld [vmem:[#allocation7 + $0x210] sm:$0xff]
    %v379 = vld [vmem:[#allocation7 + $0x218] sm:$0xff]
    %v380 = vld [vmem:[#allocation7 + $0x220] sm:$0xff]
    %v381 = vld [vmem:[#allocation7 + $0x228] sm:$0xff]
    %v382 = vld [vmem:[#allocation7 + $0x230] sm:$0xff]
    %v383 = vld [vmem:[#allocation7 + $0x238] sm:$0xff]
    %v384 = vld [vmem:[#allocation7 + $0x240] sm:$0xff]
    %v385 = vld [vmem:[#allocation7 + $0x248] sm:$0xff]
    %v386 = vld [vmem:[#allocation7 + $0x250] sm:$0xff]
    %v387 = vld [vmem:[#allocation7 + $0x258] sm:$0xff]
    %v388 = vld [vmem:[#allocation7 + $0x260] sm:$0xff]
    %v389 = vld [vmem:[#allocation7 + $0x268] sm:$0xff]
    %v390 = vld [vmem:[#allocation7 + $0x270] sm:$0xff]
    %v391 = vld [vmem:[#allocation7 + $0x278] sm:$0xff]
    %v392 = vld [vmem:[#allocation7 + $0x280] sm:$0xff]
    %v393 = vld [vmem:[#allocation7 + $0x288] sm:$0xff]
    %v394 = vld [vmem:[#allocation7 + $0x290] sm:$0xff]
    %v395 = vld [vmem:[#allocation7 + $0x298] sm:$0xff]
    %v396 = vld [vmem:[#allocation7 + $0x2a0] sm:$0xff]
    %v397 = vld [vmem:[#allocation7 + $0x2a8] sm:$0xff]
    %v398 = vld [vmem:[#allocation7 + $0x2b0] sm:$0xff]
    %v399 = vld [vmem:[#allocation7 + $0x2b8] sm:$0xff]
    %v400 = vld [vmem:[#allocation7 + $0x2c0] sm:$0xff]
    %v401 = vld [vmem:[#allocation7 + $0x2c8] sm:$0xff]
    %v402 = vld [vmem:[#allocation7 + $0x2d0] sm:$0xff]
    %v403 = vld [vmem:[#allocation7 + $0x2d8] sm:$0xff]
    %v404 = vld [vmem:[#allocation7 + $0x2e0] sm:$0xff]
    %v405 = vld [vmem:[#allocation7 + $0x2e8] sm:$0xff]
    %v406 = vld [vmem:[#allocation7 + $0x2f0] sm:$0xff]
    %v407 = vld [vmem:[#allocation7 + $0x2f8] sm:$0xff]
    %v408 = vld [vmem:[%s5] sm:$0xf]
    %v410 = vperm.slane %v408, 0
    %v411 = vperm.slane %v408, 1
    %v412 = vperm.slane %v408, 2
    %v413 = vperm.slane %v408, 3
    %v514 = vunpack.c.l.b16 %v312
    %v515 = vunpack.c.h.b16 %v312
    %v516 = vunpack.c.l.b16 %v313
    %v517 = vunpack.c.h.b16 %v313
    %v518 = vunpack.c.l.b16 %v314
    %v519 = vunpack.c.h.b16 %v314
    %v520 = vunpack.c.l.b16 %v315
    %v521 = vunpack.c.h.b16 %v315
    %v522 = vunpack.c.l.b16 %v316
    %v523 = vunpack.c.h.b16 %v316
    %v524 = vunpack.c.l.b16 %v317
    %v525 = vunpack.c.h.b16 %v317
    %v526 = vunpack.c.l.b16 %v318
    %v527 = vunpack.c.h.b16 %v318
    %v528 = vunpack.c.l.b16 %v319
    %v529 = vunpack.c.h.b16 %v319
    %v530 = vunpack.c.l.b16 %v320
    %v531 = vunpack.c.h.b16 %v320
    %v532 = vunpack.c.l.b16 %v321
    %v533 = vunpack.c.h.b16 %v321
    %v534 = vunpack.c.l.b16 %v322
    %v535 = vunpack.c.h.b16 %v322
    %v536 = vunpack.c.l.b16 %v323
    %v537 = vunpack.c.h.b16 %v323
    %v538 = vunpack.c.l.b16 %v324
    %v539 = vunpack.c.h.b16 %v324
    %v540 = vunpack.c.l.b16 %v325
    %v541 = vunpack.c.h.b16 %v325
    %v542 = vunpack.c.l.b16 %v326
    %v543 = vunpack.c.h.b16 %v326
    %v544 = vunpack.c.l.b16 %v327
    %v545 = vunpack.c.h.b16 %v327
    %v546 = vunpack.c.l.b16 %v328
    %v547 = vunpack.c.h.b16 %v328
    %v548 = vunpack.c.l.b16 %v329
    %v549 = vunpack.c.h.b16 %v329
    %v550 = vunpack.c.l.b16 %v330
    %v551 = vunpack.c.h.b16 %v330
    %v552 = vunpack.c.l.b16 %v331
    %v553 = vunpack.c.h.b16 %v331
    %v554 = vunpack.c.l.b16 %v332
    %v555 = vunpack.c.h.b16 %v332
    %v556 = vunpack.c.l.b16 %v333
    %v557 = vunpack.c.h.b16 %v333
    %v558 = vunpack.c.l.b16 %v334
    %v559 = vunpack.c.h.b16 %v334
    %v560 = vunpack.c.l.b16 %v335
    %v561 = vunpack.c.h.b16 %v335
    %v562 = vunpack.c.l.b16 %v336
    %v563 = vunpack.c.h.b16 %v336
    %v564 = vunpack.c.l.b16 %v337
    %v565 = vunpack.c.h.b16 %v337
    %v566 = vunpack.c.l.b16 %v338
    %v567 = vunpack.c.h.b16 %v338
    %v568 = vunpack.c.l.b16 %v339
    %v569 = vunpack.c.h.b16 %v339
    %v570 = vunpack.c.l.b16 %v340
    %v571 = vunpack.c.h.b16 %v340
    %v572 = vunpack.c.l.b16 %v341
    %v573 = vunpack.c.h.b16 %v341
    %v574 = vunpack.c.l.b16 %v342
    %v575 = vunpack.c.h.b16 %v342
    %v576 = vunpack.c.l.b16 %v343
    %v577 = vunpack.c.h.b16 %v343
    %v578 = vunpack.c.l.b16 %v344
    %v579 = vunpack.c.h.b16 %v344
    %v580 = vunpack.c.l.b16 %v345
    %v581 = vunpack.c.h.b16 %v345
    %v582 = vunpack.c.l.b16 %v346
    %v583 = vunpack.c.h.b16 %v346
    %v584 = vunpack.c.l.b16 %v347
    %v585 = vunpack.c.h.b16 %v347
    %v586 = vunpack.c.l.b16 %v348
    %v587 = vunpack.c.h.b16 %v348
    %v588 = vunpack.c.l.b16 %v349
    %v589 = vunpack.c.h.b16 %v349
    %v590 = vunpack.c.l.b16 %v350
    %v591 = vunpack.c.h.b16 %v350
    %v592 = vunpack.c.l.b16 %v351
    %v593 = vunpack.c.h.b16 %v351
    %v594 = vunpack.c.l.b16 %v352
    %v595 = vunpack.c.h.b16 %v352
    %v596 = vunpack.c.l.b16 %v353
    %v597 = vunpack.c.h.b16 %v353
    %v598 = vunpack.c.l.b16 %v354
    %v599 = vunpack.c.h.b16 %v354
    %v600 = vunpack.c.l.b16 %v355
    %v601 = vunpack.c.h.b16 %v355
    %v602 = vunpack.c.l.b16 %v356
    %v603 = vunpack.c.h.b16 %v356
    %v604 = vunpack.c.l.b16 %v357
    %v605 = vunpack.c.h.b16 %v357
    %v606 = vunpack.c.l.b16 %v358
    %v607 = vunpack.c.h.b16 %v358
    %v608 = vunpack.c.l.b16 %v359
    %v609 = vunpack.c.h.b16 %v359
    %v610 = vunpack.c.l.b16 %v360
    %v611 = vunpack.c.h.b16 %v360
    %v612 = vunpack.c.l.b16 %v361
    %v613 = vunpack.c.h.b16 %v361
    %v614 = vunpack.c.l.b16 %v362
    %v615 = vunpack.c.h.b16 %v362
    %v616 = vunpack.c.l.b16 %v363
    %v617 = vunpack.c.h.b16 %v363
    %v618 = vunpack.c.l.b16 %v364
    %v619 = vunpack.c.h.b16 %v364
    %v620 = vunpack.c.l.b16 %v365
    %v621 = vunpack.c.h.b16 %v365
    %v622 = vunpack.c.l.b16 %v366
    %v623 = vunpack.c.h.b16 %v366
    %v624 = vunpack.c.l.b16 %v367
    %v625 = vunpack.c.h.b16 %v367
    %v626 = vunpack.c.l.b16 %v368
    %v627 = vunpack.c.h.b16 %v368
    %v628 = vunpack.c.l.b16 %v369
    %v629 = vunpack.c.h.b16 %v369
    %v630 = vunpack.c.l.b16 %v370
    %v631 = vunpack.c.h.b16 %v370
    %v632 = vunpack.c.l.b16 %v371
    %v633 = vunpack.c.h.b16 %v371
    %v634 = vunpack.c.l.b16 %v372
    %v635 = vunpack.c.h.b16 %v372
    %v636 = vunpack.c.l.b16 %v373
    %v637 = vunpack.c.h.b16 %v373
    %v638 = vunpack.c.l.b16 %v374
    %v639 = vunpack.c.h.b16 %v374
    %v640 = vunpack.c.l.b16 %v375
    %v641 = vunpack.c.h.b16 %v375
    %v642 = vunpack.c.l.b16 %v376
    %v643 = vunpack.c.h.b16 %v376
    %v644 = vunpack.c.l.b16 %v377
    %v645 = vunpack.c.h.b16 %v377
    %v646 = vunpack.c.l.b16 %v378
    %v647 = vunpack.c.h.b16 %v378
    %v648 = vunpack.c.l.b16 %v379
    %v649 = vunpack.c.h.b16 %v379
    %v650 = vunpack.c.l.b16 %v380
    %v651 = vunpack.c.h.b16 %v380
    %v652 = vunpack.c.l.b16 %v381
    %v653 = vunpack.c.h.b16 %v381
    %v654 = vunpack.c.l.b16 %v382
    %v655 = vunpack.c.h.b16 %v382
    %v656 = vunpack.c.l.b16 %v383
    %v657 = vunpack.c.h.b16 %v383
    %v658 = vunpack.c.l.b16 %v384
    %v659 = vunpack.c.h.b16 %v384
    %v660 = vunpack.c.l.b16 %v385
    %v661 = vunpack.c.h.b16 %v385
    %v662 = vunpack.c.l.b16 %v386
    %v663 = vunpack.c.h.b16 %v386
    %v664 = vunpack.c.l.b16 %v387
    %v665 = vunpack.c.h.b16 %v387
    %v666 = vunpack.c.l.b16 %v388
    %v667 = vunpack.c.h.b16 %v388
    %v668 = vunpack.c.l.b16 %v389
    %v669 = vunpack.c.h.b16 %v389
    %v670 = vunpack.c.l.b16 %v390
    %v671 = vunpack.c.h.b16 %v390
    %v672 = vunpack.c.l.b16 %v391
    %v673 = vunpack.c.h.b16 %v391
    %v674 = vunpack.c.l.b16 %v392
    %v675 = vunpack.c.h.b16 %v392
    %v676 = vunpack.c.l.b16 %v393
    %v677 = vunpack.c.h.b16 %v393
    %v678 = vunpack.c.l.b16 %v394
    %v679 = vunpack.c.h.b16 %v394
    %v680 = vunpack.c.l.b16 %v395
    %v681 = vunpack.c.h.b16 %v395
    %v682 = vunpack.c.l.b16 %v396
    %v683 = vunpack.c.h.b16 %v396
    %v684 = vunpack.c.l.b16 %v397
    %v685 = vunpack.c.h.b16 %v397
    %v686 = vunpack.c.l.b16 %v398
    %v687 = vunpack.c.h.b16 %v398
    %v688 = vunpack.c.l.b16 %v399
    %v689 = vunpack.c.h.b16 %v399
    %v690 = vunpack.c.l.b16 %v400
    %v691 = vunpack.c.h.b16 %v400
    %v692 = vunpack.c.l.b16 %v401
    %v693 = vunpack.c.h.b16 %v401
    %v694 = vunpack.c.l.b16 %v402
    %v695 = vunpack.c.h.b16 %v402
    %v696 = vunpack.c.l.b16 %v403
    %v697 = vunpack.c.h.b16 %v403
    %v698 = vunpack.c.l.b16 %v404
    %v699 = vunpack.c.h.b16 %v404
    %v700 = vunpack.c.l.b16 %v405
    %v701 = vunpack.c.h.b16 %v405
    %v702 = vunpack.c.l.b16 %v406
    %v703 = vunpack.c.h.b16 %v406
    %v704 = vunpack.c.l.b16 %v407
    %v705 = vunpack.c.h.b16 %v407
    %v706 = vpack.c.b16 %v518, %v514
    %v707 = vpack.c.b16 %v519, %v515
    %v708 = vpack.c.b16 %v520, %v516
    %v709 = vpack.c.b16 %v521, %v517
    %v710 = vpack.c.b16 %v526, %v522
    %v711 = vpack.c.b16 %v527, %v523
    %v712 = vpack.c.b16 %v528, %v524
    %v713 = vpack.c.b16 %v529, %v525
    %v714 = vpack.c.b16 %v534, %v530
    %v715 = vpack.c.b16 %v535, %v531
    %v716 = vpack.c.b16 %v536, %v532
    %v717 = vpack.c.b16 %v537, %v533
    %v718 = vpack.c.b16 %v542, %v538
    %v719 = vpack.c.b16 %v543, %v539
    %v720 = vpack.c.b16 %v544, %v540
    %v721 = vpack.c.b16 %v545, %v541
    %v722 = vpack.c.b16 %v550, %v546
    %v723 = vpack.c.b16 %v551, %v547
    %v724 = vpack.c.b16 %v552, %v548
    %v725 = vpack.c.b16 %v553, %v549
    %v726 = vpack.c.b16 %v558, %v554
    %v727 = vpack.c.b16 %v559, %v555
    %v728 = vpack.c.b16 %v560, %v556
    %v729 = vpack.c.b16 %v561, %v557
    %v730 = vpack.c.b16 %v566, %v562
    %v731 = vpack.c.b16 %v567, %v563
    %v732 = vpack.c.b16 %v568, %v564
    %v733 = vpack.c.b16 %v569, %v565
    %v734 = vpack.c.b16 %v574, %v570
    %v735 = vpack.c.b16 %v575, %v571
    %v736 = vpack.c.b16 %v576, %v572
    %v737 = vpack.c.b16 %v577, %v573
    %v738 = vpack.c.b16 %v582, %v578
    %v739 = vpack.c.b16 %v583, %v579
    %v740 = vpack.c.b16 %v584, %v580
    %v741 = vpack.c.b16 %v585, %v581
    %v742 = vpack.c.b16 %v590, %v586
    %v743 = vpack.c.b16 %v591, %v587
    %v744 = vpack.c.b16 %v592, %v588
    %v745 = vpack.c.b16 %v593, %v589
    %v746 = vpack.c.b16 %v598, %v594
    %v747 = vpack.c.b16 %v599, %v595
    %v748 = vpack.c.b16 %v600, %v596
    %v749 = vpack.c.b16 %v601, %v597
    %v750 = vpack.c.b16 %v606, %v602
    %v751 = vpack.c.b16 %v607, %v603
    %v752 = vpack.c.b16 %v608, %v604
    %v753 = vpack.c.b16 %v609, %v605
    %v754 = vpack.c.b16 %v614, %v610
    %v755 = vpack.c.b16 %v615, %v611
    %v756 = vpack.c.b16 %v616, %v612
    %v757 = vpack.c.b16 %v617, %v613
    %v758 = vpack.c.b16 %v622, %v618
    %v759 = vpack.c.b16 %v623, %v619
    %v760 = vpack.c.b16 %v624, %v620
    %v761 = vpack.c.b16 %v625, %v621
    %v762 = vpack.c.b16 %v630, %v626
    %v763 = vpack.c.b16 %v631, %v627
    %v764 = vpack.c.b16 %v632, %v628
    %v765 = vpack.c.b16 %v633, %v629
    %v766 = vpack.c.b16 %v638, %v634
    %v767 = vpack.c.b16 %v639, %v635
    %v768 = vpack.c.b16 %v640, %v636
    %v769 = vpack.c.b16 %v641, %v637
    %v770 = vpack.c.b16 %v646, %v642
    %v771 = vpack.c.b16 %v647, %v643
    %v772 = vpack.c.b16 %v648, %v644
    %v773 = vpack.c.b16 %v649, %v645
    %v774 = vpack.c.b16 %v654, %v650
    %v775 = vpack.c.b16 %v655, %v651
    %v776 = vpack.c.b16 %v656, %v652
    %v777 = vpack.c.b16 %v657, %v653
    %v778 = vpack.c.b16 %v662, %v658
    %v779 = vpack.c.b16 %v663, %v659
    %v780 = vpack.c.b16 %v664, %v660
    %v781 = vpack.c.b16 %v665, %v661
    %v782 = vpack.c.b16 %v670, %v666
    %v783 = vpack.c.b16 %v671, %v667
    %v784 = vpack.c.b16 %v672, %v668
    %v785 = vpack.c.b16 %v673, %v669
    %v786 = vpack.c.b16 %v678, %v674
    %v787 = vpack.c.b16 %v679, %v675
    %v788 = vpack.c.b16 %v680, %v676
    %v789 = vpack.c.b16 %v681, %v677
    %v790 = vpack.c.b16 %v686, %v682
    %v791 = vpack.c.b16 %v687, %v683
    %v792 = vpack.c.b16 %v688, %v684
    %v793 = vpack.c.b16 %v689, %v685
    %v794 = vpack.c.b16 %v694, %v690
    %v795 = vpack.c.b16 %v695, %v691
    %v796 = vpack.c.b16 %v696, %v692
    %v797 = vpack.c.b16 %v697, %v693
    %v798 = vpack.c.b16 %v702, %v698
    %v799 = vpack.c.b16 %v703, %v699
    %v800 = vpack.c.b16 %v704, %v700
    %v801 = vpack.c.b16 %v705, %v701
    %898 = vmatpush.bf16.msra.mxu0 %v734
    %899 = vmatpush.bf16.msra.mxu0 %v730
    %900 = vmatpush.bf16.msra.mxu0 %v726
    %901 = vmatpush.bf16.msra.mxu0 %v722
    %902 = vmatpush.bf16.msra.mxu0 %v718
    %903 = vmatpush.bf16.msra.mxu0 %v714
    %904 = vmatpush.bf16.msra.mxu0 %v710
    %905 = vmatpush.bf16.msra.mxu0 %v706
    %906 = vmatmul.bf16.gmra.mxu0 %v309
    %v907 = vpop.f32.mrf.mxu0
    %v908 = vadd.f32 %v410, %v907
    %v909 = vpop.f32.mrf.mxu0
    %910 = vdwg.mxu0
    %911 = vmatpush.bf16.msra.mxu0 %v766
    %912 = vmatpush.bf16.msra.mxu0 %v762
    %913 = vmatpush.bf16.msra.mxu0 %v758
    %914 = vmatpush.bf16.msra.mxu0 %v754
    %915 = vmatpush.bf16.msra.mxu0 %v750
    %916 = vmatpush.bf16.msra.mxu0 %v746
    %917 = vmatpush.bf16.msra.mxu0 %v742
    %918 = vmatpush.bf16.msra.mxu0 %v738
    %919 = vmatmul.bf16.gmra.mxu0 %v310
    %v920 = vpop.f32.mrf.mxu0
    %v921 = vadd.f32 %v908, %v920
    %v922 = vpop.f32.mrf.mxu0
    %923 = vdwg.mxu0
    %924 = vmatpush.bf16.msra.mxu0 %v798
    %925 = vmatpush.bf16.msra.mxu0 %v794
    %926 = vmatpush.bf16.msra.mxu0 %v790
    %927 = vmatpush.bf16.msra.mxu0 %v786
    %928 = vmatpush.bf16.msra.mxu0 %v782
    %929 = vmatpush.bf16.msra.mxu0 %v778
    %930 = vmatpush.bf16.msra.mxu0 %v774
    %931 = vmatpush.bf16.msra.mxu0 %v770
    %932 = vmatmul.bf16.gmra.mxu0 %v311
    %v933 = vpop.f32.mrf.mxu0
    %v934 = vadd.f32 %v921, %v933
    %v935 = vpop.f32.mrf.mxu0
    %936 = vdwg.mxu0
    %937 = vmatpush.bf16.msra.mxu0 %v735
    %938 = vmatpush.bf16.msra.mxu0 %v731
    %939 = vmatpush.bf16.msra.mxu0 %v727
    %940 = vmatpush.bf16.msra.mxu0 %v723
    %941 = vmatpush.bf16.msra.mxu0 %v719
    %942 = vmatpush.bf16.msra.mxu0 %v715
    %943 = vmatpush.bf16.msra.mxu0 %v711
    %944 = vmatpush.bf16.msra.mxu0 %v707
    %945 = vmatmul.bf16.gmra.mxu0 %v309
    %v946 = vpop.f32.mrf.mxu0
    %v947 = vadd.f32 %v411, %v946
    %v948 = vpop.f32.mrf.mxu0
    %949 = vdwg.mxu0
    %950 = vmatpush.bf16.msra.mxu0 %v767
    %951 = vmatpush.bf16.msra.mxu0 %v763
    %952 = vmatpush.bf16.msra.mxu0 %v759
    %953 = vmatpush.bf16.msra.mxu0 %v755
    %954 = vmatpush.bf16.msra.mxu0 %v751
    %955 = vmatpush.bf16.msra.mxu0 %v747
    %956 = vmatpush.bf16.msra.mxu0 %v743
    %957 = vmatpush.bf16.msra.mxu0 %v739
    %958 = vmatmul.bf16.gmra.mxu0 %v310
    %v959 = vpop.f32.mrf.mxu0
    %v960 = vadd.f32 %v947, %v959
    %v961 = vpop.f32.mrf.mxu0
    %962 = vdwg.mxu0
    %963 = vmatpush.bf16.msra.mxu0 %v799
    %964 = vmatpush.bf16.msra.mxu0 %v795
    %965 = vmatpush.bf16.msra.mxu0 %v791
    %966 = vmatpush.bf16.msra.mxu0 %v787
    %967 = vmatpush.bf16.msra.mxu0 %v783
    %968 = vmatpush.bf16.msra.mxu0 %v779
    %969 = vmatpush.bf16.msra.mxu0 %v775
    %970 = vmatpush.bf16.msra.mxu0 %v771
    %971 = vmatmul.bf16.gmra.mxu0 %v311
    %v972 = vpop.f32.mrf.mxu0
    %v973 = vadd.f32 %v960, %v972
    %v974 = vpop.f32.mrf.mxu0
    %975 = vdwg.mxu0
    %976 = vmatpush.bf16.msra.mxu0 %v736
    %977 = vmatpush.bf16.msra.mxu0 %v732
    %978 = vmatpush.bf16.msra.mxu0 %v728
    %979 = vmatpush.bf16.msra.mxu0 %v724
    %980 = vmatpush.bf16.msra.mxu0 %v720
    %981 = vmatpush.bf16.msra.mxu0 %v716
    %982 = vmatpush.bf16.msra.mxu0 %v712
    %983 = vmatpush.bf16.msra.mxu0 %v708
    %984 = vmatmul.bf16.gmra.mxu0 %v309
    %v985 = vpop.f32.mrf.mxu0
    %v986 = vadd.f32 %v412, %v985
    %v987 = vpop.f32.mrf.mxu0
    %988 = vdwg.mxu0
    %989 = vmatpush.bf16.msra.mxu0 %v768
    %990 = vmatpush.bf16.msra.mxu0 %v764
    %991 = vmatpush.bf16.msra.mxu0 %v760
    %992 = vmatpush.bf16.msra.mxu0 %v756
    %993 = vmatpush.bf16.msra.mxu0 %v752
    %994 = vmatpush.bf16.msra.mxu0 %v748
    %995 = vmatpush.bf16.msra.mxu0 %v744
    %996 = vmatpush.bf16.msra.mxu0 %v740
    %997 = vmatmul.bf16.gmra.mxu0 %v310
    %v998 = vpop.f32.mrf.mxu0
    %v999 = vadd.f32 %v986, %v998
    %v1000 = vpop.f32.mrf.mxu0
    %1001 = vdwg.mxu0
    %1002 = vmatpush.bf16.msra.mxu0 %v800
    %1003 = vmatpush.bf16.msra.mxu0 %v796
    %1004 = vmatpush.bf16.msra.mxu0 %v792
    %1005 = vmatpush.bf16.msra.mxu0 %v788
    %1006 = vmatpush.bf16.msra.mxu0 %v784
    %1007 = vmatpush.bf16.msra.mxu0 %v780
    %1008 = vmatpush.bf16.msra.mxu0 %v776
    %1009 = vmatpush.bf16.msra.mxu0 %v772
    %1010 = vmatmul.bf16.gmra.mxu0 %v311
    %v1011 = vpop.f32.mrf.mxu0
    %v1012 = vadd.f32 %v999, %v1011
    %v1013 = vpop.f32.mrf.mxu0
    %1014 = vdwg.mxu0
    %1015 = vmatpush.bf16.msra.mxu0 %v737
    %1016 = vmatpush.bf16.msra.mxu0 %v733
    %1017 = vmatpush.bf16.msra.mxu0 %v729
    %1018 = vmatpush.bf16.msra.mxu0 %v725
    %1019 = vmatpush.bf16.msra.mxu0 %v721
    %1020 = vmatpush.bf16.msra.mxu0 %v717
    %1021 = vmatpush.bf16.msra.mxu0 %v713
    %1022 = vmatpush.bf16.msra.mxu0 %v709
    %1023 = vmatmul.bf16.gmra.mxu0 %v309
    %v1024 = vpop.f32.mrf.mxu0
    %v1025 = vadd.f32 %v413, %v1024
    %v1026 = vpop.f32.mrf.mxu0
    %1027 = vdwg.mxu0
    %1028 = vmatpush.bf16.msra.mxu0 %v769
    %1029 = vmatpush.bf16.msra.mxu0 %v765
    %1030 = vmatpush.bf16.msra.mxu0 %v761
    %1031 = vmatpush.bf16.msra.mxu0 %v757
    %1032 = vmatpush.bf16.msra.mxu0 %v753
    %1033 = vmatpush.bf16.msra.mxu0 %v749
    %1034 = vmatpush.bf16.msra.mxu0 %v745
    %1035 = vmatpush.bf16.msra.mxu0 %v741
    %1036 = vmatmul.bf16.gmra.mxu0 %v310
    %v1037 = vpop.f32.mrf.mxu0
    %v1038 = vadd.f32 %v1025, %v1037
    %v1039 = vpop.f32.mrf.mxu0
    %1040 = vdwg.mxu0
    %1041 = vmatpush.bf16.msra.mxu0 %v801
    %1042 = vmatpush.bf16.msra.mxu0 %v797
    %1043 = vmatpush.bf16.msra.mxu0 %v793
    %1044 = vmatpush.bf16.msra.mxu0 %v789
    %1045 = vmatpush.bf16.msra.mxu0 %v785
    %1046 = vmatpush.bf16.msra.mxu0 %v781
    %1047 = vmatpush.bf16.msra.mxu0 %v777
    %1048 = vmatpush.bf16.msra.mxu0 %v773
    %1049 = vmatmul.bf16.gmra.mxu0 %v311
    %v1050 = vpop.f32.mrf.mxu0
    %v1051 = vadd.f32 %v1038, %v1050
    %v1052 = vpop.f32.mrf.mxu0
    %1053 = vdwg.mxu0
    %1054 = vst [vmem:[#allocation2] sm:$0xff] %v934
    %1055 = vst [vmem:[#allocation2 + $0x8] sm:$0xff] %v973
    %1056 = vst [vmem:[#allocation2 + $0x10] sm:$0xff] %v1012
    %1057 = vst [vmem:[#allocation2 + $0x18] sm:$0xff] %v1051
    %v1058 = vld [vmem:[#allocation3] sm:$0x1]
    %v1059 = vld [vmem:[#allocation4] sm:$0x1]
    %s1060 = smul.u32 0, 4
    %s1061 = smul.addr %s1060, 8
    %s1062 = scalar_lea.vmem [#allocation2], %s1061
    %v1063 = vld [vmem:[%s1062] sm:$0xff]
    %v1064 = vld [vmem:[%s1062 + $0x8] sm:$0xff]
    %v1065 = vld [vmem:[%s1062 + $0x10] sm:$0xff]
    %v1066 = vld [vmem:[%s1062 + $0x18] sm:$0xff]
    %v1067 = vpack.c.bf16 %v1058, %v1058
    %v1068 = vld [vmem:[#allocation9] sm:$0xff]
    %v1069 = vld [vmem:[#allocation9 + $0x8] sm:$0xff]
    %v1070 = vld [vmem:[#allocation9 + $0x10] sm:$0xff]
    %v1071 = vld [vmem:[#allocation9 + $0x18] sm:$0xff]
    %v1072 = vld [vmem:[#allocation9 + $0x20] sm:$0xff]
    %v1073 = vld [vmem:[#allocation9 + $0x28] sm:$0xff]
    %v1074 = vld [vmem:[#allocation9 + $0x30] sm:$0xff]
    %v1075 = vld [vmem:[#allocation9 + $0x38] sm:$0xff]
    %v1076 = vld [vmem:[#allocation9 + $0x40] sm:$0xff]
    %v1077 = vld [vmem:[#allocation9 + $0x48] sm:$0xff]
    %v1078 = vld [vmem:[#allocation9 + $0x50] sm:$0xff]
    %v1079 = vld [vmem:[#allocation9 + $0x58] sm:$0xff]
    %v1080 = vld [vmem:[#allocation9 + $0x60] sm:$0xff]
    %v1081 = vld [vmem:[#allocation9 + $0x68] sm:$0xff]
    %v1082 = vld [vmem:[#allocation9 + $0x70] sm:$0xff]
    %v1083 = vld [vmem:[#allocation9 + $0x78] sm:$0xff]
    %v1084 = vld [vmem:[#allocation9 + $0x80] sm:$0xff]
    %v1085 = vld [vmem:[#allocation9 + $0x88] sm:$0xff]
    %v1086 = vld [vmem:[#allocation9 + $0x90] sm:$0xff]
    %v1087 = vld [vmem:[#allocation9 + $0x98] sm:$0xff]
    %v1088 = vld [vmem:[#allocation9 + $0xa0] sm:$0xff]
    %v1089 = vld [vmem:[#allocation9 + $0xa8] sm:$0xff]
    %v1090 = vld [vmem:[#allocation9 + $0xb0] sm:$0xff]
    %v1091 = vld [vmem:[#allocation9 + $0xb8] sm:$0xff]
    %v1092 = vld [vmem:[#allocation9 + $0xc0] sm:$0xff]
    %v1093 = vld [vmem:[#allocation9 + $0xc8] sm:$0xff]
    %v1094 = vld [vmem:[#allocation9 + $0xd0] sm:$0xff]
    %v1095 = vld [vmem:[#allocation9 + $0xd8] sm:$0xff]
    %v1096 = vld [vmem:[#allocation9 + $0xe0] sm:$0xff]
    %v1097 = vld [vmem:[#allocation9 + $0xe8] sm:$0xff]
    %v1098 = vld [vmem:[#allocation9 + $0xf0] sm:$0xff]
    %v1099 = vld [vmem:[#allocation9 + $0xf8] sm:$0xff]
    %v1132 = vunpack.c.l.b16 %v1068
    %v1133 = vunpack.c.h.b16 %v1068
    %v1134 = vunpack.c.l.b16 %v1069
    %v1135 = vunpack.c.h.b16 %v1069
    %v1136 = vunpack.c.l.b16 %v1070
    %v1137 = vunpack.c.h.b16 %v1070
    %v1138 = vunpack.c.l.b16 %v1071
    %v1139 = vunpack.c.h.b16 %v1071
    %v1140 = vunpack.c.l.b16 %v1072
    %v1141 = vunpack.c.h.b16 %v1072
    %v1142 = vunpack.c.l.b16 %v1073
    %v1143 = vunpack.c.h.b16 %v1073
    %v1144 = vunpack.c.l.b16 %v1074
    %v1145 = vunpack.c.h.b16 %v1074
    %v1146 = vunpack.c.l.b16 %v1075
    %v1147 = vunpack.c.h.b16 %v1075
    %v1148 = vunpack.c.l.b16 %v1076
    %v1149 = vunpack.c.h.b16 %v1076
    %v1150 = vunpack.c.l.b16 %v1077
    %v1151 = vunpack.c.h.b16 %v1077
    %v1152 = vunpack.c.l.b16 %v1078
    %v1153 = vunpack.c.h.b16 %v1078
    %v1154 = vunpack.c.l.b16 %v1079
    %v1155 = vunpack.c.h.b16 %v1079
    %v1156 = vunpack.c.l.b16 %v1080
    %v1157 = vunpack.c.h.b16 %v1080
    %v1158 = vunpack.c.l.b16 %v1081
    %v1159 = vunpack.c.h.b16 %v1081
    %v1160 = vunpack.c.l.b16 %v1082
    %v1161 = vunpack.c.h.b16 %v1082
    %v1162 = vunpack.c.l.b16 %v1083
    %v1163 = vunpack.c.h.b16 %v1083
    %v1164 = vunpack.c.l.b16 %v1084
    %v1165 = vunpack.c.h.b16 %v1084
    %v1166 = vunpack.c.l.b16 %v1085
    %v1167 = vunpack.c.h.b16 %v1085
    %v1168 = vunpack.c.l.b16 %v1086
    %v1169 = vunpack.c.h.b16 %v1086
    %v1170 = vunpack.c.l.b16 %v1087
    %v1171 = vunpack.c.h.b16 %v1087
    %v1172 = vunpack.c.l.b16 %v1088
    %v1173 = vunpack.c.h.b16 %v1088
    %v1174 = vunpack.c.l.b16 %v1089
    %v1175 = vunpack.c.h.b16 %v1089
    %v1176 = vunpack.c.l.b16 %v1090
    %v1177 = vunpack.c.h.b16 %v1090
    %v1178 = vunpack.c.l.b16 %v1091
    %v1179 = vunpack.c.h.b16 %v1091
    %v1180 = vunpack.c.l.b16 %v1092
    %v1181 = vunpack.c.h.b16 %v1092
    %v1182 = vunpack.c.l.b16 %v1093
    %v1183 = vunpack.c.h.b16 %v1093
    %v1184 = vunpack.c.l.b16 %v1094
    %v1185 = vunpack.c.h.b16 %v1094
    %v1186 = vunpack.c.l.b16 %v1095
    %v1187 = vunpack.c.h.b16 %v1095
    %v1188 = vunpack.c.l.b16 %v1096
    %v1189 = vunpack.c.h.b16 %v1096
    %v1190 = vunpack.c.l.b16 %v1097
    %v1191 = vunpack.c.h.b16 %v1097
    %v1192 = vunpack.c.l.b16 %v1098
    %v1193 = vunpack.c.h.b16 %v1098
    %v1194 = vunpack.c.l.b16 %v1099
    %v1195 = vunpack.c.h.b16 %v1099
    %v1196 = vpack.c.b16 %v1136, %v1132
    %v1197 = vpack.c.b16 %v1137, %v1133
    %v1198 = vpack.c.b16 %v1138, %v1134
    %v1199 = vpack.c.b16 %v1139, %v1135
    %v1200 = vpack.c.b16 %v1144, %v1140
    %v1201 = vpack.c.b16 %v1145, %v1141
    %v1202 = vpack.c.b16 %v1146, %v1142
    %v1203 = vpack.c.b16 %v1147, %v1143
    %v1204 = vpack.c.b16 %v1152, %v1148
    %v1205 = vpack.c.b16 %v1153, %v1149
    %v1206 = vpack.c.b16 %v1154, %v1150
    %v1207 = vpack.c.b16 %v1155, %v1151
    %v1208 = vpack.c.b16 %v1160, %v1156
    %v1209 = vpack.c.b16 %v1161, %v1157
    %v1210 = vpack.c.b16 %v1162, %v1158
    %v1211 = vpack.c.b16 %v1163, %v1159
    %v1212 = vpack.c.b16 %v1168, %v1164
    %v1213 = vpack.c.b16 %v1169, %v1165
    %v1214 = vpack.c.b16 %v1170, %v1166
    %v1215 = vpack.c.b16 %v1171, %v1167
    %v1216 = vpack.c.b16 %v1176, %v1172
    %v1217 = vpack.c.b16 %v1177, %v1173
    %v1218 = vpack.c.b16 %v1178, %v1174
    %v1219 = vpack.c.b16 %v1179, %v1175
    %v1220 = vpack.c.b16 %v1184, %v1180
    %v1221 = vpack.c.b16 %v1185, %v1181
    %v1222 = vpack.c.b16 %v1186, %v1182
    %v1223 = vpack.c.b16 %v1187, %v1183
    %v1224 = vpack.c.b16 %v1192, %v1188
    %v1225 = vpack.c.b16 %v1193, %v1189
    %v1226 = vpack.c.b16 %v1194, %v1190
    %v1227 = vpack.c.b16 %v1195, %v1191
    %1260 = vmatpush.bf16.msra.mxu0 %v1224
    %1261 = vmatpush.bf16.msra.mxu0 %v1220
    %1262 = vmatpush.bf16.msra.mxu0 %v1216
    %1263 = vmatpush.bf16.msra.mxu0 %v1212
    %1264 = vmatpush.bf16.msra.mxu0 %v1208
    %1265 = vmatpush.bf16.msra.mxu0 %v1204
    %1266 = vmatpush.bf16.msra.mxu0 %v1200
    %1267 = vmatpush.bf16.msra.mxu0 %v1196
    %1268 = vmatmul.bf16.gmra.mxu0 %v1067
    %v1269 = vpop.f32.mrf.mxu0
    %v1270 = vadd.f32 0.0, %v1269
    %v1271 = vpop.f32.mrf.mxu0
    %1272 = vdwg.mxu0
    %1273 = vmatpush.bf16.msra.mxu0 %v1225
    %1274 = vmatpush.bf16.msra.mxu0 %v1221
    %1275 = vmatpush.bf16.msra.mxu0 %v1217
    %1276 = vmatpush.bf16.msra.mxu0 %v1213
    %1277 = vmatpush.bf16.msra.mxu0 %v1209
    %1278 = vmatpush.bf16.msra.mxu0 %v1205
    %1279 = vmatpush.bf16.msra.mxu0 %v1201
    %1280 = vmatpush.bf16.msra.mxu0 %v1197
    %1281 = vmatmul.bf16.gmra.mxu0 %v1067
    %v1282 = vpop.f32.mrf.mxu0
    %v1283 = vadd.f32 0.0, %v1282
    %v1284 = vpop.f32.mrf.mxu0
    %1285 = vdwg.mxu0
    %1286 = vmatpush.bf16.msra.mxu0 %v1226
    %1287 = vmatpush.bf16.msra.mxu0 %v1222
    %1288 = vmatpush.bf16.msra.mxu0 %v1218
    %1289 = vmatpush.bf16.msra.mxu0 %v1214
    %1290 = vmatpush.bf16.msra.mxu0 %v1210
    %1291 = vmatpush.bf16.msra.mxu0 %v1206
    %1292 = vmatpush.bf16.msra.mxu0 %v1202
    %1293 = vmatpush.bf16.msra.mxu0 %v1198
    %1294 = vmatmul.bf16.gmra.mxu0 %v1067
    %v1295 = vpop.f32.mrf.mxu0
    %v1296 = vadd.f32 0.0, %v1295
    %v1297 = vpop.f32.mrf.mxu0
    %1298 = vdwg.mxu0
    %1299 = vmatpush.bf16.msra.mxu0 %v1227
    %1300 = vmatpush.bf16.msra.mxu0 %v1223
    %1301 = vmatpush.bf16.msra.mxu0 %v1219
    %1302 = vmatpush.bf16.msra.mxu0 %v1215
    %1303 = vmatpush.bf16.msra.mxu0 %v1211
    %1304 = vmatpush.bf16.msra.mxu0 %v1207
    %1305 = vmatpush.bf16.msra.mxu0 %v1203
    %1306 = vmatpush.bf16.msra.mxu0 %v1199
    %1307 = vmatmul.bf16.gmra.mxu0 %v1067
    %v1308 = vpop.f32.mrf.mxu0
    %v1309 = vadd.f32 0.0, %v1308
    %v1310 = vpop.f32.mrf.mxu0
    %1311 = vdwg.mxu0
    %v1312 = vadd.f32 %v1063, %v1270
    %v1313 = vadd.f32 %v1064, %v1283
    %v1314 = vadd.f32 %v1065, %v1296
    %v1315 = vadd.f32 %v1066, %v1309
    %v1316 = vtanh.pop %v1312
    %v1317 = vtanh.pop %v1313
    %v1318 = vtanh.pop %v1314
    %v1319 = vtanh.pop %v1315
    %v1320 = vmul.f32 %v1316, 0.5
    %v1321 = vmul.f32 %v1317, 0.5
    %v1322 = vmul.f32 %v1318, 0.5
    %v1323 = vadd.f32 %v1320, 0.5
    %v1324 = vadd.f32 %v1321, 0.5
    %v1325 = vadd.f32 %v1322, 0.5
    %v1326 = vmul.f32 %v1324, %v1059
    %v1327 = vmul.f32 %v1323, %v1319
    %v1328 = vadd.f32 %v1326, %v1327
    %v1329 = vtanh.pop %v1328
    %v1330 = vmul.f32 %v1325, %v1329
    %v1331 = vpack.c.bf16 %v1330, %v1330
    %1332 = vmatpush.bf16.msra.mxu0 %v1224
    %1333 = vmatpush.bf16.msra.mxu0 %v1220
    %1334 = vmatpush.bf16.msra.mxu0 %v1216
    %1335 = vmatpush.bf16.msra.mxu0 %v1212
    %1336 = vmatpush.bf16.msra.mxu0 %v1208
    %1337 = vmatpush.bf16.msra.mxu0 %v1204
    %1338 = vmatpush.bf16.msra.mxu0 %v1200
    %1339 = vmatpush.bf16.msra.mxu0 %v1196
    %1340 = vmatmul.bf16.gmra.mxu0 %v1331
    %v1341 = vpop.f32.mrf.mxu0
    %v1342 = vadd.f32 0.0, %v1341
    %v1343 = vpop.f32.mrf.mxu0
    %1344 = vdwg.mxu0
    %1345 = vmatpush.bf16.msra.mxu0 %v1225
    %1346 = vmatpush.bf16.msra.mxu0 %v1221
    %1347 = vmatpush.bf16.msra.mxu0 %v1217
    %1348 = vmatpush.bf16.msra.mxu0 %v1213
    %1349 = vmatpush.bf16.msra.mxu0 %v1209
    %1350 = vmatpush.bf16.msra.mxu0 %v1205
    %1351 = vmatpush.bf16.msra.mxu0 %v1201
    %1352 = vmatpush.bf16.msra.mxu0 %v1197
    %1353 = vmatmul.bf16.gmra.mxu0 %v1331
    %v1354 = vpop.f32.mrf.mxu0
    %v1355 = vadd.f32 0.0, %v1354
    %v1356 = vpop.f32.mrf.mxu0
    %1357 = vdwg.mxu0
    %1358 = vmatpush.bf16.msra.mxu0 %v1226
    %1359 = vmatpush.bf16.msra.mxu0 %v1222
    %1360 = vmatpush.bf16.msra.mxu0 %v1218
    %1361 = vmatpush.bf16.msra.mxu0 %v1214
    %1362 = vmatpush.bf16.msra.mxu0 %v1210
    %1363 = vmatpush.bf16.msra.mxu0 %v1206
    %1364 = vmatpush.bf16.msra.mxu0 %v1202
    %1365 = vmatpush.bf16.msra.mxu0 %v1198
    %1366 = vmatmul.bf16.gmra.mxu0 %v1331
    %v1367 = vpop.f32.mrf.mxu0
    %v1368 = vadd.f32 0.0, %v1367
    %v1369 = vpop.f32.mrf.mxu0
    %1370 = vdwg.mxu0
    %1371 = vmatpush.bf16.msra.mxu0 %v1227
    %1372 = vmatpush.bf16.msra.mxu0 %v1223
    %1373 = vmatpush.bf16.msra.mxu0 %v1219
    %1374 = vmatpush.bf16.msra.mxu0 %v1215
    %1375 = vmatpush.bf16.msra.mxu0 %v1211
    %1376 = vmatpush.bf16.msra.mxu0 %v1207
    %1377 = vmatpush.bf16.msra.mxu0 %v1203
    %1378 = vmatpush.bf16.msra.mxu0 %v1199
    %1379 = vmatmul.bf16.gmra.mxu0 %v1331
    %v1380 = vpop.f32.mrf.mxu0
    %v1381 = vadd.f32 0.0, %v1380
    %v1382 = vpop.f32.mrf.mxu0
    %1383 = vdwg.mxu0
    %v1388 = vrot.slane %v1342, 7
    %v1389 = vrot.slane %v1355, 7
    %v1390 = vrot.slane %v1368, 7
    %v1391 = vrot.slane %v1381, 7
    %v1396 = vadd.f32 %v1063, %v1388
    %v1397 = vadd.f32 %v1064, %v1389
    %v1398 = vadd.f32 %v1065, %v1390
    %v1399 = vadd.f32 %v1066, %v1391
    %v1400 = vtanh.pop %v1396
    %v1401 = vtanh.pop %v1397
    %v1402 = vtanh.pop %v1398
    %v1403 = vtanh.pop %v1399
    %v1404 = vmul.f32 %v1400, 0.5
    %v1405 = vmul.f32 %v1401, 0.5
    %v1406 = vmul.f32 %v1402, 0.5
    %v1407 = vadd.f32 %v1404, 0.5
    %v1408 = vadd.f32 %v1405, 0.5
    %v1409 = vadd.f32 %v1406, 0.5
    %v1411 = vrot.slane %v1328, 7
    %v1413 = vmul.f32 %v1408, %v1411
    %v1414 = vmul.f32 %v1407, %v1403
    %v1415 = vadd.f32 %v1413, %v1414
    %v1416 = vtanh.pop %v1415
    %v1417 = vmul.f32 %v1409, %v1416
    %v1418 = vpack.c.bf16 %v1417, %v1417
    %v1420 = vshrl.u32 %v1418, 16
    %1423 = vmatpush.bf16.msra.mxu0 %v1224
    %1424 = vmatpush.bf16.msra.mxu0 %v1220
    %1425 = vmatpush.bf16.msra.mxu0 %v1216
    %1426 = vmatpush.bf16.msra.mxu0 %v1212
    %1427 = vmatpush.bf16.msra.mxu0 %v1208
    %1428 = vmatpush.bf16.msra.mxu0 %v1204
    %1429 = vmatpush.bf16.msra.mxu0 %v1200
    %1430 = vmatpush.bf16.msra.mxu0 %v1196
    %1431 = vmatmul.bf16.gmra.mxu0 %v1420
    %v1432 = vpop.f32.mrf.mxu0
    %v1433 = vadd.f32 0.0, %v1432
    %v1434 = vpop.f32.mrf.mxu0
    %1435 = vdwg.mxu0
    %1436 = vmatpush.bf16.msra.mxu0 %v1225
    %1437 = vmatpush.bf16.msra.mxu0 %v1221
    %1438 = vmatpush.bf16.msra.mxu0 %v1217
    %1439 = vmatpush.bf16.msra.mxu0 %v1213
    %1440 = vmatpush.bf16.msra.mxu0 %v1209
    %1441 = vmatpush.bf16.msra.mxu0 %v1205
    %1442 = vmatpush.bf16.msra.mxu0 %v1201
    %1443 = vmatpush.bf16.msra.mxu0 %v1197
    %1444 = vmatmul.bf16.gmra.mxu0 %v1420
    %v1445 = vpop.f32.mrf.mxu0
    %v1446 = vadd.f32 0.0, %v1445
    %v1447 = vpop.f32.mrf.mxu0
    %1448 = vdwg.mxu0
    %1449 = vmatpush.bf16.msra.mxu0 %v1226
    %1450 = vmatpush.bf16.msra.mxu0 %v1222
    %1451 = vmatpush.bf16.msra.mxu0 %v1218
    %1452 = vmatpush.bf16.msra.mxu0 %v1214
    %1453 = vmatpush.bf16.msra.mxu0 %v1210
    %1454 = vmatpush.bf16.msra.mxu0 %v1206
    %1455 = vmatpush.bf16.msra.mxu0 %v1202
    %1456 = vmatpush.bf16.msra.mxu0 %v1198
    %1457 = vmatmul.bf16.gmra.mxu0 %v1420
    %v1458 = vpop.f32.mrf.mxu0
    %v1459 = vadd.f32 0.0, %v1458
    %v1460 = vpop.f32.mrf.mxu0
    %1461 = vdwg.mxu0
    %1462 = vmatpush.bf16.msra.mxu0 %v1227
    %1463 = vmatpush.bf16.msra.mxu0 %v1223
    %1464 = vmatpush.bf16.msra.mxu0 %v1219
    %1465 = vmatpush.bf16.msra.mxu0 %v1215
    %1466 = vmatpush.bf16.msra.mxu0 %v1211
    %1467 = vmatpush.bf16.msra.mxu0 %v1207
    %1468 = vmatpush.bf16.msra.mxu0 %v1203
    %1469 = vmatpush.bf16.msra.mxu0 %v1199
    %1470 = vmatmul.bf16.gmra.mxu0 %v1420
    %v1471 = vpop.f32.mrf.mxu0
    %v1472 = vadd.f32 0.0, %v1471
    %v1473 = vpop.f32.mrf.mxu0
    %1474 = vdwg.mxu0
    %v1479 = vrot.slane %v1433, 6
    %v1480 = vrot.slane %v1446, 6
    %v1481 = vrot.slane %v1459, 6
    %v1482 = vrot.slane %v1472, 6
    %v1487 = vadd.f32 %v1063, %v1479
    %v1488 = vadd.f32 %v1064, %v1480
    %v1489 = vadd.f32 %v1065, %v1481
    %v1490 = vadd.f32 %v1066, %v1482
    %v1491 = vtanh.pop %v1487
    %v1492 = vtanh.pop %v1488
    %v1493 = vtanh.pop %v1489
    %v1494 = vtanh.pop %v1490
    %v1495 = vmul.f32 %v1491, 0.5
    %v1496 = vmul.f32 %v1492, 0.5
    %v1497 = vmul.f32 %v1493, 0.5
    %v1498 = vadd.f32 %v1495, 0.5
    %v1499 = vadd.f32 %v1496, 0.5
    %v1500 = vadd.f32 %v1497, 0.5
    %v1502 = vrot.slane %v1415, 7
    %v1504 = vmul.f32 %v1499, %v1502
    %v1505 = vmul.f32 %v1498, %v1494
    %v1506 = vadd.f32 %v1504, %v1505
    %v1507 = vtanh.pop %v1506
    %v1508 = vmul.f32 %v1500, %v1507
    %v1509 = vpack.c.bf16 %v1508, %v1508
    %v1511 = vrot.slane %v1509, 1
    %1513 = vmatpush.bf16.msra.mxu0 %v1224
    %1514 = vmatpush.bf16.msra.mxu0 %v1220
    %1515 = vmatpush.bf16.msra.mxu0 %v1216
    %1516 = vmatpush.bf16.msra.mxu0 %v1212
    %1517 = vmatpush.bf16.msra.mxu0 %v1208
    %1518 = vmatpush.bf16.msra.mxu0 %v1204
    %1519 = vmatpush.bf16.msra.mxu0 %v1200
    %1520 = vmatpush.bf16.msra.mxu0 %v1196
    %1521 = vmatmul.bf16.gmra.mxu0 %v1511
    %v1522 = vpop.f32.mrf.mxu0
    %v1523 = vadd.f32 0.0, %v1522
    %v1524 = vpop.f32.mrf.mxu0
    %1525 = vdwg.mxu0
    %1526 = vmatpush.bf16.msra.mxu0 %v1225
    %1527 = vmatpush.bf16.msra.mxu0 %v1221
    %1528 = vmatpush.bf16.msra.mxu0 %v1217
    %1529 = vmatpush.bf16.msra.mxu0 %v1213
    %1530 = vmatpush.bf16.msra.mxu0 %v1209
    %1531 = vmatpush.bf16.msra.mxu0 %v1205
    %1532 = vmatpush.bf16.msra.mxu0 %v1201
    %1533 = vmatpush.bf16.msra.mxu0 %v1197
    %1534 = vmatmul.bf16.gmra.mxu0 %v1511
    %v1535 = vpop.f32.mrf.mxu0
    %v1536 = vadd.f32 0.0, %v1535
    %v1537 = vpop.f32.mrf.mxu0
    %1538 = vdwg.mxu0
    %1539 = vmatpush.bf16.msra.mxu0 %v1226
    %1540 = vmatpush.bf16.msra.mxu0 %v1222
    %1541 = vmatpush.bf16.msra.mxu0 %v1218
    %1542 = vmatpush.bf16.msra.mxu0 %v1214
    %1543 = vmatpush.bf16.msra.mxu0 %v1210
    %1544 = vmatpush.bf16.msra.mxu0 %v1206
    %1545 = vmatpush.bf16.msra.mxu0 %v1202
    %1546 = vmatpush.bf16.msra.mxu0 %v1198
    %1547 = vmatmul.bf16.gmra.mxu0 %v1511
    %v1548 = vpop.f32.mrf.mxu0
    %v1549 = vadd.f32 0.0, %v1548
    %v1550 = vpop.f32.mrf.mxu0
    %1551 = vdwg.mxu0
    %1552 = vmatpush.bf16.msra.mxu0 %v1227
    %1553 = vmatpush.bf16.msra.mxu0 %v1223
    %1554 = vmatpush.bf16.msra.mxu0 %v1219
    %1555 = vmatpush.bf16.msra.mxu0 %v1215
    %1556 = vmatpush.bf16.msra.mxu0 %v1211
    %1557 = vmatpush.bf16.msra.mxu0 %v1207
    %1558 = vmatpush.bf16.msra.mxu0 %v1203
    %1559 = vmatpush.bf16.msra.mxu0 %v1199
    %1560 = vmatmul.bf16.gmra.mxu0 %v1511
    %v1561 = vpop.f32.mrf.mxu0
    %v1562 = vadd.f32 0.0, %v1561
    %v1563 = vpop.f32.mrf.mxu0
    %1564 = vdwg.mxu0
    %v1569 = vrot.slane %v1523, 5
    %v1570 = vrot.slane %v1536, 5
    %v1571 = vrot.slane %v1549, 5
    %v1572 = vrot.slane %v1562, 5
    %v1577 = vadd.f32 %v1063, %v1569
    %v1578 = vadd.f32 %v1064, %v1570
    %v1579 = vadd.f32 %v1065, %v1571
    %v1580 = vadd.f32 %v1066, %v1572
    %v1581 = vtanh.pop %v1577
    %v1582 = vtanh.pop %v1578
    %v1583 = vtanh.pop %v1579
    %v1584 = vtanh.pop %v1580
    %v1585 = vmul.f32 %v1581, 0.5
    %v1586 = vmul.f32 %v1582, 0.5
    %v1587 = vmul.f32 %v1583, 0.5
    %v1588 = vadd.f32 %v1585, 0.5
    %v1589 = vadd.f32 %v1586, 0.5
    %v1590 = vadd.f32 %v1587, 0.5
    %v1592 = vrot.slane %v1506, 7
    %v1594 = vmul.f32 %v1589, %v1592
    %v1595 = vmul.f32 %v1588, %v1584
    %v1596 = vadd.f32 %v1594, %v1595
    %v1597 = vtanh.pop %v1596
    %v1598 = vmul.f32 %v1590, %v1597
    %v1599 = vpack.c.bf16 %v1598, %v1598
    %v1601 = vshrl.u32 %v1599, 16
    %v1603 = vrot.slane %v1601, 1
    %1605 = vmatpush.bf16.msra.mxu0 %v1224
    %1606 = vmatpush.bf16.msra.mxu0 %v1220
    %1607 = vmatpush.bf16.msra.mxu0 %v1216
    %1608 = vmatpush.bf16.msra.mxu0 %v1212
    %1609 = vmatpush.bf16.msra.mxu0 %v1208
    %1610 = vmatpush.bf16.msra.mxu0 %v1204
    %1611 = vmatpush.bf16.msra.mxu0 %v1200
    %1612 = vmatpush.bf16.msra.mxu0 %v1196
    %1613 = vmatmul.bf16.gmra.mxu0 %v1603
    %v1614 = vpop.f32.mrf.mxu0
    %v1615 = vadd.f32 0.0, %v1614
    %v1616 = vpop.f32.mrf.mxu0
    %1617 = vdwg.mxu0
    %1618 = vmatpush.bf16.msra.mxu0 %v1225
    %1619 = vmatpush.bf16.msra.mxu0 %v1221
    %1620 = vmatpush.bf16.msra.mxu0 %v1217
    %1621 = vmatpush.bf16.msra.mxu0 %v1213
    %1622 = vmatpush.bf16.msra.mxu0 %v1209
    %1623 = vmatpush.bf16.msra.mxu0 %v1205
    %1624 = vmatpush.bf16.msra.mxu0 %v1201
    %1625 = vmatpush.bf16.msra.mxu0 %v1197
    %1626 = vmatmul.bf16.gmra.mxu0 %v1603
    %v1627 = vpop.f32.mrf.mxu0
    %v1628 = vadd.f32 0.0, %v1627
    %v1629 = vpop.f32.mrf.mxu0
    %1630 = vdwg.mxu0
    %1631 = vmatpush.bf16.msra.mxu0 %v1226
    %1632 = vmatpush.bf16.msra.mxu0 %v1222
    %1633 = vmatpush.bf16.msra.mxu0 %v1218
    %1634 = vmatpush.bf16.msra.mxu0 %v1214
    %1635 = vmatpush.bf16.msra.mxu0 %v1210
    %1636 = vmatpush.bf16.msra.mxu0 %v1206
    %1637 = vmatpush.bf16.msra.mxu0 %v1202
    %1638 = vmatpush.bf16.msra.mxu0 %v1198
    %1639 = vmatmul.bf16.gmra.mxu0 %v1603
    %v1640 = vpop.f32.mrf.mxu0
    %v1641 = vadd.f32 0.0, %v1640
    %v1642 = vpop.f32.mrf.mxu0
    %1643 = vdwg.mxu0
    %1644 = vmatpush.bf16.msra.mxu0 %v1227
    %1645 = vmatpush.bf16.msra.mxu0 %v1223
    %1646 = vmatpush.bf16.msra.mxu0 %v1219
    %1647 = vmatpush.bf16.msra.mxu0 %v1215
    %1648 = vmatpush.bf16.msra.mxu0 %v1211
    %1649 = vmatpush.bf16.msra.mxu0 %v1207
    %1650 = vmatpush.bf16.msra.mxu0 %v1203
    %1651 = vmatpush.bf16.msra.mxu0 %v1199
    %1652 = vmatmul.bf16.gmra.mxu0 %v1603
    %v1653 = vpop.f32.mrf.mxu0
    %v1654 = vadd.f32 0.0, %v1653
    %v1655 = vpop.f32.mrf.mxu0
    %1656 = vdwg.mxu0
    %v1661 = vrot.slane %v1615, 4
    %v1662 = vrot.slane %v1628, 4
    %v1663 = vrot.slane %v1641, 4
    %v1664 = vrot.slane %v1654, 4
    %v1669 = vadd.f32 %v1063, %v1661
    %v1670 = vadd.f32 %v1064, %v1662
    %v1671 = vadd.f32 %v1065, %v1663
    %v1672 = vadd.f32 %v1066, %v1664
    %v1673 = vtanh.pop %v1669
    %v1674 = vtanh.pop %v1670
    %v1675 = vtanh.pop %v1671
    %v1676 = vtanh.pop %v1672
    %v1677 = vmul.f32 %v1673, 0.5
    %v1678 = vmul.f32 %v1674, 0.5
    %v1679 = vmul.f32 %v1675, 0.5
    %v1680 = vadd.f32 %v1677, 0.5
    %v1681 = vadd.f32 %v1678, 0.5
    %v1682 = vadd.f32 %v1679, 0.5
    %v1684 = vrot.slane %v1596, 7
    %v1686 = vmul.f32 %v1681, %v1684
    %v1687 = vmul.f32 %v1680, %v1676
    %v1688 = vadd.f32 %v1686, %v1687
    %v1689 = vtanh.pop %v1688
    %v1690 = vmul.f32 %v1682, %v1689
    %v1691 = vpack.c.bf16 %v1690, %v1690
    %v1693 = vrot.slane %v1691, 2
    %1695 = vmatpush.bf16.msra.mxu0 %v1224
    %1696 = vmatpush.bf16.msra.mxu0 %v1220
    %1697 = vmatpush.bf16.msra.mxu0 %v1216
    %1698 = vmatpush.bf16.msra.mxu0 %v1212
    %1699 = vmatpush.bf16.msra.mxu0 %v1208
    %1700 = vmatpush.bf16.msra.mxu0 %v1204
    %1701 = vmatpush.bf16.msra.mxu0 %v1200
    %1702 = vmatpush.bf16.msra.mxu0 %v1196
    %1703 = vmatmul.bf16.gmra.mxu0 %v1693
    %v1704 = vpop.f32.mrf.mxu0
    %v1705 = vadd.f32 0.0, %v1704
    %v1706 = vpop.f32.mrf.mxu0
    %1707 = vdwg.mxu0
    %1708 = vmatpush.bf16.msra.mxu0 %v1225
    %1709 = vmatpush.bf16.msra.mxu0 %v1221
    %1710 = vmatpush.bf16.msra.mxu0 %v1217
    %1711 = vmatpush.bf16.msra.mxu0 %v1213
    %1712 = vmatpush.bf16.msra.mxu0 %v1209
    %1713 = vmatpush.bf16.msra.mxu0 %v1205
    %1714 = vmatpush.bf16.msra.mxu0 %v1201
    %1715 = vmatpush.bf16.msra.mxu0 %v1197
    %1716 = vmatmul.bf16.gmra.mxu0 %v1693
    %v1717 = vpop.f32.mrf.mxu0
    %v1718 = vadd.f32 0.0, %v1717
    %v1719 = vpop.f32.mrf.mxu0
    %1720 = vdwg.mxu0
    %1721 = vmatpush.bf16.msra.mxu0 %v1226
    %1722 = vmatpush.bf16.msra.mxu0 %v1222
    %1723 = vmatpush.bf16.msra.mxu0 %v1218
    %1724 = vmatpush.bf16.msra.mxu0 %v1214
    %1725 = vmatpush.bf16.msra.mxu0 %v1210
    %1726 = vmatpush.bf16.msra.mxu0 %v1206
    %1727 = vmatpush.bf16.msra.mxu0 %v1202
    %1728 = vmatpush.bf16.msra.mxu0 %v1198
    %1729 = vmatmul.bf16.gmra.mxu0 %v1693
    %v1730 = vpop.f32.mrf.mxu0
    %v1731 = vadd.f32 0.0, %v1730
    %v1732 = vpop.f32.mrf.mxu0
    %1733 = vdwg.mxu0
    %1734 = vmatpush.bf16.msra.mxu0 %v1227
    %1735 = vmatpush.bf16.msra.mxu0 %v1223
    %1736 = vmatpush.bf16.msra.mxu0 %v1219
    %1737 = vmatpush.bf16.msra.mxu0 %v1215
    %1738 = vmatpush.bf16.msra.mxu0 %v1211
    %1739 = vmatpush.bf16.msra.mxu0 %v1207
    %1740 = vmatpush.bf16.msra.mxu0 %v1203
    %1741 = vmatpush.bf16.msra.mxu0 %v1199
    %1742 = vmatmul.bf16.gmra.mxu0 %v1693
    %v1743 = vpop.f32.mrf.mxu0
    %v1744 = vadd.f32 0.0, %v1743
    %v1745 = vpop.f32.mrf.mxu0
    %1746 = vdwg.mxu0
    %v1751 = vrot.slane %v1705, 3
    %v1752 = vrot.slane %v1718, 3
    %v1753 = vrot.slane %v1731, 3
    %v1754 = vrot.slane %v1744, 3
    %v1759 = vadd.f32 %v1063, %v1751
    %v1760 = vadd.f32 %v1064, %v1752
    %v1761 = vadd.f32 %v1065, %v1753
    %v1762 = vadd.f32 %v1066, %v1754
    %v1763 = vtanh.pop %v1759
    %v1764 = vtanh.pop %v1760
    %v1765 = vtanh.pop %v1761
    %v1766 = vtanh.pop %v1762
    %v1767 = vmul.f32 %v1763, 0.5
    %v1768 = vmul.f32 %v1764, 0.5
    %v1769 = vmul.f32 %v1765, 0.5
    %v1770 = vadd.f32 %v1767, 0.5
    %v1771 = vadd.f32 %v1768, 0.5
    %v1772 = vadd.f32 %v1769, 0.5
    %v1774 = vrot.slane %v1688, 7
    %v1776 = vmul.f32 %v1771, %v1774
    %v1777 = vmul.f32 %v1770, %v1766
    %v1778 = vadd.f32 %v1776, %v1777
    %v1779 = vtanh.pop %v1778
    %v1780 = vmul.f32 %v1772, %v1779
    %v1781 = vpack.c.bf16 %v1780, %v1780
    %v1783 = vshrl.u32 %v1781, 16
    %v1785 = vrot.slane %v1783, 2
    %1787 = vmatpush.bf16.msra.mxu0 %v1224
    %1788 = vmatpush.bf16.msra.mxu0 %v1220
    %1789 = vmatpush.bf16.msra.mxu0 %v1216
    %1790 = vmatpush.bf16.msra.mxu0 %v1212
    %1791 = vmatpush.bf16.msra.mxu0 %v1208
    %1792 = vmatpush.bf16.msra.mxu0 %v1204
    %1793 = vmatpush.bf16.msra.mxu0 %v1200
    %1794 = vmatpush.bf16.msra.mxu0 %v1196
    %1795 = vmatmul.bf16.gmra.mxu0 %v1785
    %v1796 = vpop.f32.mrf.mxu0
    %v1797 = vadd.f32 0.0, %v1796
    %v1798 = vpop.f32.mrf.mxu0
    %1799 = vdwg.mxu0
    %1800 = vmatpush.bf16.msra.mxu0 %v1225
    %1801 = vmatpush.bf16.msra.mxu0 %v1221
    %1802 = vmatpush.bf16.msra.mxu0 %v1217
    %1803 = vmatpush.bf16.msra.mxu0 %v1213
    %1804 = vmatpush.bf16.msra.mxu0 %v1209
    %1805 = vmatpush.bf16.msra.mxu0 %v1205
    %1806 = vmatpush.bf16.msra.mxu0 %v1201
    %1807 = vmatpush.bf16.msra.mxu0 %v1197
    %1808 = vmatmul.bf16.gmra.mxu0 %v1785
    %v1809 = vpop.f32.mrf.mxu0
    %v1810 = vadd.f32 0.0, %v1809
    %v1811 = vpop.f32.mrf.mxu0
    %1812 = vdwg.mxu0
    %1813 = vmatpush.bf16.msra.mxu0 %v1226
    %1814 = vmatpush.bf16.msra.mxu0 %v1222
    %1815 = vmatpush.bf16.msra.mxu0 %v1218
    %1816 = vmatpush.bf16.msra.mxu0 %v1214
    %1817 = vmatpush.bf16.msra.mxu0 %v1210
    %1818 = vmatpush.bf16.msra.mxu0 %v1206
    %1819 = vmatpush.bf16.msra.mxu0 %v1202
    %1820 = vmatpush.bf16.msra.mxu0 %v1198
    %1821 = vmatmul.bf16.gmra.mxu0 %v1785
    %v1822 = vpop.f32.mrf.mxu0
    %v1823 = vadd.f32 0.0, %v1822
    %v1824 = vpop.f32.mrf.mxu0
    %1825 = vdwg.mxu0
    %1826 = vmatpush.bf16.msra.mxu0 %v1227
    %1827 = vmatpush.bf16.msra.mxu0 %v1223
    %1828 = vmatpush.bf16.msra.mxu0 %v1219
    %1829 = vmatpush.bf16.msra.mxu0 %v1215
    %1830 = vmatpush.bf16.msra.mxu0 %v1211
    %1831 = vmatpush.bf16.msra.mxu0 %v1207
    %1832 = vmatpush.bf16.msra.mxu0 %v1203
    %1833 = vmatpush.bf16.msra.mxu0 %v1199
    %1834 = vmatmul.bf16.gmra.mxu0 %v1785
    %v1835 = vpop.f32.mrf.mxu0
    %v1836 = vadd.f32 0.0, %v1835
    %v1837 = vpop.f32.mrf.mxu0
    %1838 = vdwg.mxu0
    %v1843 = vrot.slane %v1797, 2
    %v1844 = vrot.slane %v1810, 2
    %v1845 = vrot.slane %v1823, 2
    %v1846 = vrot.slane %v1836, 2
    %v1851 = vadd.f32 %v1063, %v1843
    %v1852 = vadd.f32 %v1064, %v1844
    %v1853 = vadd.f32 %v1065, %v1845
    %v1854 = vadd.f32 %v1066, %v1846
    %v1855 = vtanh.pop %v1851
    %v1856 = vtanh.pop %v1852
    %v1857 = vtanh.pop %v1853
    %v1858 = vtanh.pop %v1854
    %v1859 = vmul.f32 %v1855, 0.5
    %v1860 = vmul.f32 %v1856, 0.5
    %v1861 = vmul.f32 %v1857, 0.5
    %v1862 = vadd.f32 %v1859, 0.5
    %v1863 = vadd.f32 %v1860, 0.5
    %v1864 = vadd.f32 %v1861, 0.5
    %v1866 = vrot.slane %v1778, 7
    %v1868 = vmul.f32 %v1863, %v1866
    %v1869 = vmul.f32 %v1862, %v1858
    %v1870 = vadd.f32 %v1868, %v1869
    %v1871 = vtanh.pop %v1870
    %v1872 = vmul.f32 %v1864, %v1871
    %v1873 = vpack.c.bf16 %v1872, %v1872
    %v1875 = vrot.slane %v1873, 3
    %1877 = vmatpush.bf16.msra.mxu0 %v1224
    %1878 = vmatpush.bf16.msra.mxu0 %v1220
    %1879 = vmatpush.bf16.msra.mxu0 %v1216
    %1880 = vmatpush.bf16.msra.mxu0 %v1212
    %1881 = vmatpush.bf16.msra.mxu0 %v1208
    %1882 = vmatpush.bf16.msra.mxu0 %v1204
    %1883 = vmatpush.bf16.msra.mxu0 %v1200
    %1884 = vmatpush.bf16.msra.mxu0 %v1196
    %1885 = vmatmul.bf16.gmra.mxu0 %v1875
    %v1886 = vpop.f32.mrf.mxu0
    %v1887 = vadd.f32 0.0, %v1886
    %v1888 = vpop.f32.mrf.mxu0
    %1889 = vdwg.mxu0
    %1890 = vmatpush.bf16.msra.mxu0 %v1225
    %1891 = vmatpush.bf16.msra.mxu0 %v1221
    %1892 = vmatpush.bf16.msra.mxu0 %v1217
    %1893 = vmatpush.bf16.msra.mxu0 %v1213
    %1894 = vmatpush.bf16.msra.mxu0 %v1209
    %1895 = vmatpush.bf16.msra.mxu0 %v1205
    %1896 = vmatpush.bf16.msra.mxu0 %v1201
    %1897 = vmatpush.bf16.msra.mxu0 %v1197
    %1898 = vmatmul.bf16.gmra.mxu0 %v1875
    %v1899 = vpop.f32.mrf.mxu0
    %v1900 = vadd.f32 0.0, %v1899
    %v1901 = vpop.f32.mrf.mxu0
    %1902 = vdwg.mxu0
    %1903 = vmatpush.bf16.msra.mxu0 %v1226
    %1904 = vmatpush.bf16.msra.mxu0 %v1222
    %1905 = vmatpush.bf16.msra.mxu0 %v1218
    %1906 = vmatpush.bf16.msra.mxu0 %v1214
    %1907 = vmatpush.bf16.msra.mxu0 %v1210
    %1908 = vmatpush.bf16.msra.mxu0 %v1206
    %1909 = vmatpush.bf16.msra.mxu0 %v1202
    %1910 = vmatpush.bf16.msra.mxu0 %v1198
    %1911 = vmatmul.bf16.gmra.mxu0 %v1875
    %v1912 = vpop.f32.mrf.mxu0
    %v1913 = vadd.f32 0.0, %v1912
    %v1914 = vpop.f32.mrf.mxu0
    %1915 = vdwg.mxu0
    %1916 = vmatpush.bf16.msra.mxu0 %v1227
    %1917 = vmatpush.bf16.msra.mxu0 %v1223
    %1918 = vmatpush.bf16.msra.mxu0 %v1219
    %1919 = vmatpush.bf16.msra.mxu0 %v1215
    %1920 = vmatpush.bf16.msra.mxu0 %v1211
    %1921 = vmatpush.bf16.msra.mxu0 %v1207
    %1922 = vmatpush.bf16.msra.mxu0 %v1203
    %1923 = vmatpush.bf16.msra.mxu0 %v1199
    %1924 = vmatmul.bf16.gmra.mxu0 %v1875
    %v1925 = vpop.f32.mrf.mxu0
    %v1926 = vadd.f32 0.0, %v1925
    %v1927 = vpop.f32.mrf.mxu0
    %1928 = vdwg.mxu0
    %v1933 = vrot.slane %v1887, 1
    %v1934 = vrot.slane %v1900, 1
    %v1935 = vrot.slane %v1913, 1
    %v1936 = vrot.slane %v1926, 1
    %v1941 = vadd.f32 %v1063, %v1933
    %v1942 = vadd.f32 %v1064, %v1934
    %v1943 = vadd.f32 %v1065, %v1935
    %v1944 = vadd.f32 %v1066, %v1936
    %v1945 = vtanh.pop %v1941
    %v1946 = vtanh.pop %v1942
    %v1947 = vtanh.pop %v1943
    %v1948 = vtanh.pop %v1944
    %v1949 = vmul.f32 %v1945, 0.5
    %v1950 = vmul.f32 %v1946, 0.5
    %v1951 = vmul.f32 %v1947, 0.5
    %v1952 = vadd.f32 %v1949, 0.5
    %v1953 = vadd.f32 %v1950, 0.5
    %v1954 = vadd.f32 %v1951, 0.5
    %v1956 = vrot.slane %v1870, 7
    %v1958 = vmul.f32 %v1953, %v1956
    %v1959 = vmul.f32 %v1952, %v1948
    %v1960 = vadd.f32 %v1958, %v1959
    %v1961 = vtanh.pop %v1960
    %v1962 = vmul.f32 %v1954, %v1961
    %vm1963 = vcmask 1040384
    %v1964 = vsel %vm1963, %v1330, %v1417
    %vm1965 = vcmask 1041408
    %v1966 = vsel %vm1965, %v1964, %v1508
    %vm1967 = vcmask 1042432
    %v1968 = vsel %vm1967, %v1966, %v1598
    %vm1969 = vcmask 1043456
    %v1970 = vsel %vm1969, %v1968, %v1690
    %vm1971 = vcmask 1044480
    %v1972 = vsel %vm1971, %v1970, %v1780
    %vm1973 = vcmask 1045504
    %v1974 = vsel %vm1973, %v1972, %v1872
    %vm1975 = vcmask 1046528
    %v1976 = vsel %vm1975, %v1974, %v1962
    %v1977 = vmax.f32 %v1976, 0.0
    %v1978 = vpack.c.bf16 %v1977, %v1977
    %v1979 = vld [vmem:[#allocation10] sm:$0xf]
    %v1980 = vld [vmem:[#allocation10 + $0x4] sm:$0xf]
    %v1981 = vld [vmem:[#allocation10 + $0x8] sm:$0xf]
    %v1982 = vld [vmem:[#allocation10 + $0xc] sm:$0xf]
    %v1983 = vld [vmem:[#allocation10 + $0x10] sm:$0xf]
    %v1984 = vld [vmem:[#allocation10 + $0x14] sm:$0xf]
    %v1985 = vld [vmem:[#allocation10 + $0x18] sm:$0xf]
    %v1986 = vld [vmem:[#allocation10 + $0x1c] sm:$0xf]
    %v1987 = vld [vmem:[#allocation10 + $0x20] sm:$0xf]
    %v1988 = vld [vmem:[#allocation10 + $0x24] sm:$0xf]
    %v1989 = vld [vmem:[#allocation10 + $0x28] sm:$0xf]
    %v1990 = vld [vmem:[#allocation10 + $0x2c] sm:$0xf]
    %v1991 = vld [vmem:[#allocation10 + $0x30] sm:$0xf]
    %v1992 = vld [vmem:[#allocation10 + $0x34] sm:$0xf]
    %v1993 = vld [vmem:[#allocation10 + $0x38] sm:$0xf]
    %v1994 = vld [vmem:[#allocation10 + $0x3c] sm:$0xf]
    %v1995 = vld [vmem:[%s7] sm:$0x1]
    %v1997 = vperm.slane %v1995, 0
    %v2015 = vunpack.c.l.b16 %v1979
    %v2016 = vunpack.c.l.b16 %v1980
    %v2017 = vunpack.c.l.b16 %v1981
    %v2018 = vunpack.c.l.b16 %v1982
    %v2019 = vunpack.c.l.b16 %v1983
    %v2020 = vunpack.c.l.b16 %v1984
    %v2021 = vunpack.c.l.b16 %v1985
    %v2022 = vunpack.c.l.b16 %v1986
    %v2023 = vunpack.c.l.b16 %v1987
    %v2024 = vunpack.c.l.b16 %v1988
    %v2025 = vunpack.c.l.b16 %v1989
    %v2026 = vunpack.c.l.b16 %v1990
    %v2027 = vunpack.c.l.b16 %v1991
    %v2028 = vunpack.c.l.b16 %v1992
    %v2029 = vunpack.c.l.b16 %v1993
    %v2030 = vunpack.c.l.b16 %v1994
    %v2031 = vpack.c.b16 %v2016, %v2015
    %v2032 = vpack.c.b16 %v2018, %v2017
    %v2033 = vpack.c.b16 %v2020, %v2019
    %v2034 = vpack.c.b16 %v2022, %v2021
    %v2035 = vpack.c.b16 %v2024, %v2023
    %v2036 = vpack.c.b16 %v2026, %v2025
    %v2037 = vpack.c.b16 %v2028, %v2027
    %v2038 = vpack.c.b16 %v2030, %v2029
    %2047 = vmatpush.bf16.msra.mxu0 %v2038
    %2048 = vmatpush.bf16.msra.mxu0 %v2037
    %2049 = vmatpush.bf16.msra.mxu0 %v2036
    %2050 = vmatpush.bf16.msra.mxu0 %v2035
    %2051 = vmatpush.bf16.msra.mxu0 %v2034
    %2052 = vmatpush.bf16.msra.mxu0 %v2033
    %2053 = vmatpush.bf16.msra.mxu0 %v2032
    %2054 = vmatpush.bf16.msra.mxu0 %v2031
    %2055 = vmatmul.bf16.gmra.mxu0 %v1978
    %v2056 = vpop.f32.mrf.mxu0
    %v2057 = vadd.f32 %v1997, %v2056
    %v2058 = vpop.f32.mrf.mxu0
    %2059 = vdwg.mxu0
    %2060 = vst [vmem:[%s8] sm:$0xff] %v2057
    %2061 = vst [vmem:[#allocation3 - $0x7] sm:$0x80] %v1962
    %2062 = vst [vmem:[#allocation4 - $0x7] sm:$0x80] %v1960
    // Predicated region
    $region54: #{aq_network_logits.1} parent=1 // pred_check
      _
    $region55: #{aq_network_logits.1} parent=1 // pred_check_branch
      %2064 = sbr.rel (0) target = $region57
    $region56: #{aq_network_logits.1} parent=1 // pred_region
      _
    $region57: #{aq_network_logits.1} parent=1 // pred_fallthru
      _
    // Predicated region
    $region58: #{aq_network_logits.1} parent=1 // pred_check
      _
    $region59: #{aq_network_logits.1} parent=1 // pred_check_branch
      %2066 = sbr.rel (0) target = $region61
    $region60: #{aq_network_logits.1} parent=1 // pred_region
      _
    $region61: #{aq_network_logits.1} parent=1 // pred_fallthru
      _
    %2067 = vsyncpa [#allocation6], 1
    %2068 = vsyncpa [#allocation8], 1
    %2069 = vsyncpa [#allocation11], 1

</llo_original>
